<compile_context>
chip_gen: v7x
topology: tpu7x:2x2x1
jax: 0.10.0
libtpu: 0.0.40
codegen_flags: <defaults>
</compile_context>

<pallas_src>
import functools

import jax
import jax.numpy as jnp
from jax import lax
from jax.experimental import pallas as pl
from jax.experimental.pallas import tpu as pltpu


def _zero_halo(pad_ref):
    """Zero only the 1-pixel halo border of the (H+2, W+2, C) scratch."""
    Hp, Wp, C = pad_ref.shape
    pad_ref[0:1, :, :] = jnp.zeros((1, Wp, C), jnp.float32)
    pad_ref[Hp - 1:Hp, :, :] = jnp.zeros((1, Wp, C), jnp.float32)
    pad_ref[:, 0:1, :] = jnp.zeros((Hp, 1, C), jnp.float32)
    pad_ref[:, Wp - 1:Wp, :] = jnp.zeros((Hp, 1, C), jnp.float32)


def _conv3x3_im2col(pad_ref, t_hwc, w_ref, H, W, C):
    """3x3 'same' conv as ONE deep-K matmul on the MXU.

    pad_ref : (H+2, W+2, C) f32 VMEM scratch whose halo border is zero.
    t_hwc   : (H, W, C) f32 activation.
    w_ref   : (9*C, Cout) bf16 weights (tap-major HWIO, pre-reshaped host-side).
    returns : (H*W, Cout) f32.
    """
    pad_ref[1:H + 1, 1:W + 1, :] = t_hwc          # only the interior is rewritten
    cols = []
    for dy in range(3):
        for dx in range(3):
            cols.append(pad_ref[dy:dy + H, dx:dx + W, :].reshape(H * W, C))
    patches = jnp.concatenate(cols, axis=-1).astype(jnp.bfloat16)   # (H*W, 9C)
    return jnp.dot(patches, w_ref[...], preferred_element_type=jnp.float32)


def down_kernel(x_ref, w1_ref, b1_ref, w2_ref, s1_ref, sh1_ref,
                w3_ref, s2_ref, sh2_ref, o_ref, pad_ref,
                *, H2, W2, Cin, Cout, pack):
    # x_ref: (H, W2, 2*Cin) -- NHWC for one batch element, with each W-pair's
    # channels grouped on the lane dim (free bitcast reshape in the wrapper).
    x = x_ref[...].astype(jnp.float32)

    # ---- MaxPool2d(kernel_size=2, stride=2), fully in-kernel ---------------
    xh = jnp.max(x.reshape(H2, 2, W2, 2 * Cin), axis=1)     # rows pooled
    xp = jnp.maximum(xh[:, :, :Cin], xh[:, :, Cin:])        # cols pooled
    xf = xp.reshape(H2 * W2, Cin)                           # (HW, Cin)

    # ---- tran_channels: 1x1 conv == channel matmul (bf16 MXU, f32 acc) -----
    t0 = jnp.dot(xf.astype(jnp.bfloat16), w1_ref[...],
                 preferred_element_type=jnp.float32) + b1_ref[...]

    # ---- double33conv: Conv3x3 -> BN -> ReLU -> Conv3x3 -> BN --------------
    _zero_halo(pad_ref)   # halo stays zero; interior rewritten for each conv
    y = _conv3x3_im2col(pad_ref, t0.reshape(H2, W2, Cout), w2_ref, H2, W2, Cout)
    y = jnp.maximum(y * s1_ref[...] + sh1_ref[...], 0.0)    # conv bias folded in
    y = _conv3x3_im2col(pad_ref, y.reshape(H2, W2, Cout), w3_ref, H2, W2, Cout)
    y = y * s2_ref[...] + sh2_ref[...]                      # conv bias folded in

    # ---- residual add + final ReLU -----------------------------------------
    out = jnp.maximum(y + t0, 0.0)                          # (HW, Cout) f32

    # ---- lane-dense NCHW-flat store -----------------------------------------
    # Channel-major orientation via tiny NT selection matmuls on the MXU
    # (exact 0/1 selectors, f32 operands), then lane-concat `pack` channel
    # groups per 128-wide output row.  Avoids XLU relayouts / reshapes.
    rows = Cout // pack
    ri = lax.broadcasted_iota(jnp.int32, (rows, Cout), 0)
    ci = lax.broadcasted_iota(jnp.int32, (rows, Cout), 1)
    pieces = []
    for p in range(pack):
        sel = (ci == pack * ri + p).astype(jnp.float32)      # (rows, Cout)
        pieces.append(
            lax.dot_general(sel, out, (((1,), (1,)), ((), ())),
                            preferred_element_type=jnp.float32))   # (rows, HW)
    out_t = jnp.concatenate(pieces, axis=-1)                 # (rows, pack*HW)
    o_ref[...] = out_t.astype(o_ref.dtype)


def _prep_params(params):
    """Host-side one-time prep: bf16 MXU weights, bias->BN folding, im2col layout."""
    Cout = params["w1"].shape[-1]
    s1 = params["bn1_scale"]
    s2 = params["bn2_scale"]
    return dict(
        w1=params["w1"].astype(jnp.bfloat16),
        b1=params["b1"].astype(jnp.float32),
        w2=params["w2"].reshape(9 * Cout, Cout).astype(jnp.bfloat16),
        w3=params["w3"].reshape(9 * Cout, Cout).astype(jnp.bfloat16),
        s1=s1, sh1=params["b2"] * s1 + params["bn1_shift"],
        s2=s2, sh2=params["b3"] * s2 + params["bn2_shift"],
    )


def down_forward(x_nchw, params):
    """Forward pass of Down.  Input/output are NCHW (PyTorch convention)."""
    N, Cin, H, W = x_nchw.shape
    Cout = params["w1"].shape[-1]
    assert H % 2 == 0 and W % 2 == 0, "MaxPool2d(2,2) expects even H and W"
    H2, W2 = H // 2, W // 2
    HW = H2 * W2

    p = _prep_params(params)

    # Lane-dense output packing: `pack` channels per 128-wide output row when
    # shapes allow (for realistic sizes HW >= 128 and pack == 1 already).
    if HW < 128 and 128 % HW == 0 and Cout % (128 // HW) == 0:
        pack = 128 // HW
    else:
        pack = 1
    out_rows, out_lanes = Cout // pack, HW * pack

    # Glue: one NCHW->NHWC transpose, then a FREE bitcast reshape that groups
    # each W-pair's channels into the last dim (the pooling itself is in-kernel).
    x = jnp.transpose(x_nchw, (0, 2, 3, 1)).astype(jnp.float32)   # (N, H, W, Cin)
    x = x.reshape(N, H, W2, 2 * Cin)

    def full(shape):
        return pl.BlockSpec(shape, lambda n, _nd=len(shape): (0,) * _nd)

    kernel = functools.partial(down_kernel, H2=H2, W2=W2, Cin=Cin, Cout=Cout,
                               pack=pack)

    out_flat = pl.pallas_call(
        kernel,
        out_shape=jax.ShapeDtypeStruct((N, out_rows, out_lanes), jnp.float32),
        grid=(N,),
        in_specs=[
            pl.BlockSpec((None, H, W2, 2 * Cin), lambda n: (n, 0, 0, 0)),
            full((Cin, Cout)),       # w1  (1x1 conv, bf16)
            full((1, Cout)),         # b1
            full((9 * Cout, Cout)),  # w2  (3x3 conv, im2col layout, bf16)
            full((1, Cout)),         # bn1 scale
            full((1, Cout)),         # bn1 shift (conv bias folded in)
            full((9 * Cout, Cout)),  # w3
            full((1, Cout)),         # bn2 scale
            full((1, Cout)),         # bn2 shift (conv bias folded in)
        ],
        out_specs=pl.BlockSpec((None, out_rows, out_lanes), lambda n: (n, 0, 0)),
        scratch_shapes=[pltpu.VMEM((H2 + 2, W2 + 2, Cout), jnp.float32)],
        compiler_params=pltpu.CompilerParams(
            dimension_semantics=("parallel",)),
    )(x, p["w1"], p["b1"], p["w2"], p["s1"], p["sh1"],
      p["w3"], p["s2"], p["sh2"])

    # NCHW-flat -> NCHW is a free reshape (no transpose pass on the output).
    return out_flat.reshape(N, Cout, H2, W2)


def down_reference(x_nchw, params):
    """Pure-JAX reference (f32 everywhere) for correctness checking."""
    x = jnp.transpose(x_nchw, (0, 2, 3, 1)).astype(jnp.float32)
    N, H, W, Cin = x.shape
    H2, W2 = H // 2, W // 2
    xp = x.reshape(N, H2, 2, W2, 2, Cin).max(axis=(2, 4))
    t0 = jnp.einsum("nhwc,co->nhwo", xp, params["w1"]) + params["b1"][0]

    def conv3(t, w, b):
        return lax.conv_general_dilated(
            t, w, window_strides=(1, 1), padding="SAME",
            dimension_numbers=("NHWC", "HWIO", "NHWC")) + b[0]

    y = conv3(t0, params["w2"], params["b2"])
    y = jnp.maximum(y * params["bn1_scale"][0] + params["bn1_shift"][0], 0.0)
    y = conv3(y, params["w3"], params["b3"])
    y = y * params["bn2_scale"][0] + params["bn2_shift"][0]
    out = jnp.maximum(y + t0, 0.0)
    return jnp.transpose(out, (0, 3, 1, 2))


def init_params(key, Cin, Cout):
    ks = jax.random.split(key, 12)
    eps = 1e-5
    w1 = jax.random.normal(ks[0], (Cin, Cout), jnp.float32) / jnp.sqrt(Cin)
    b1 = 0.1 * jax.random.normal(ks[1], (1, Cout), jnp.float32)
    w2 = jax.random.normal(ks[2], (3, 3, Cout, Cout), jnp.float32) / jnp.sqrt(9.0 * Cout)
    b2 = 0.1 * jax.random.normal(ks[3], (1, Cout), jnp.float32)
    w3 = jax.random.normal(ks[4], (3, 3, Cout, Cout), jnp.float32) / jnp.sqrt(9.0 * Cout)
    b3 = 0.1 * jax.random.normal(ks[5], (1, Cout), jnp.float32)

    # BatchNorm (inference form): y = x * scale + shift
    g1 = 1.0 + 0.1 * jax.random.normal(ks[6], (Cout,), jnp.float32)
    be1 = 0.1 * jax.random.normal(ks[7], (Cout,), jnp.float32)
    m1 = 0.05 * jax.random.normal(ks[8], (Cout,), jnp.float32)
    v1 = 1.0 + 0.1 * jnp.abs(jax.random.normal(ks[9], (Cout,), jnp.float32))
    g2 = 1.0 + 0.1 * jax.random.normal(ks[10], (Cout,), jnp.float32)
    be2 = 0.1 * jax.random.normal(ks[11], (Cout,), jnp.float32)
    m2 = jnp.zeros((Cout,), jnp.float32)
    v2 = jnp.ones((Cout,), jnp.float32)

    s1 = g1 / jnp.sqrt(v1 + eps)
    sh1 = be1 - m1 * s1
    s2 = g2 / jnp.sqrt(v2 + eps)
    sh2 = be2 - m2 * s2
    return dict(
        w1=w1, b1=b1, w2=w2, b2=b2, w3=w3, b3=b3,
        bn1_scale=s1.reshape(1, Cout), bn1_shift=sh1.reshape(1, Cout),
        bn2_scale=s2.reshape(1, Cout), bn2_shift=sh2.reshape(1, Cout),
    )


if __name__ == "__main__":
    key = jax.random.PRNGKey(0)
    kx, kp = jax.random.split(key)

    N, Cin, H, W = 2, 4, 16, 16   # PyTorch NCHW input shape
    Cout = 8

    x = jax.random.normal(kx, (N, Cin, H, W), jnp.float32)
    params = init_params(kp, Cin, Cout)

    out = jax.block_until_ready(down_forward(x, params))
    ref = jax.block_until_ready(down_reference(x, params))

    assert out.shape == (N, Cout, H // 2, W // 2), out.shape
    max_err = float(jnp.max(jnp.abs(out - ref)))
    # bf16 MXU operands with f32 accumulation -> loosened tolerance vs pure f32.
    assert jnp.allclose(out, ref, atol=6e-2, rtol=6e-2), f"max_err={max_err}"
    print("KERNEL_OK")
</pallas_src>

<mosaic_0001>
module attributes {stable_mosaic.version = 11 : i64} {
  func.func @down_kernel(%arg0: i32, %arg1: memref<1x16x8x8xf32, #tpu.memory_space<vmem>>, %arg2: memref<4x8xbf16, #tpu.memory_space<vmem>>, %arg3: memref<1x8xf32, #tpu.memory_space<vmem>>, %arg4: memref<72x8xbf16, #tpu.memory_space<vmem>>, %arg5: memref<1x8xf32, #tpu.memory_space<vmem>>, %arg6: memref<1x8xf32, #tpu.memory_space<vmem>>, %arg7: memref<72x8xbf16, #tpu.memory_space<vmem>>, %arg8: memref<1x8xf32, #tpu.memory_space<vmem>>, %arg9: memref<1x8xf32, #tpu.memory_space<vmem>>, %arg10: memref<1x4x128xf32, #tpu.memory_space<vmem>>, %arg11: memref<10x10x8xf32, #tpu.memory_space<vmem>>) attributes {dimension_semantics = [#tpu.dimension_semantics<parallel>], iteration_bounds = array<i64: 2>, scalar_prefetch = 0 : i64, scratch_operands = 1 : i64, tpu.core_type = #tpu.core_type<tc>, window_params = [{transform_indices = @transform_0, window_bounds = array<i64: 1, 16, 8, 8>}, {pipeline_mode = #tpu.pipeline_mode<synchronous>, transform_indices = @transform_1, window_bounds = array<i64: 4, 8>}, {pipeline_mode = #tpu.pipeline_mode<synchronous>, transform_indices = @transform_2, window_bounds = array<i64: 1, 8>}, {pipeline_mode = #tpu.pipeline_mode<synchronous>, transform_indices = @transform_3, window_bounds = array<i64: 72, 8>}, {pipeline_mode = #tpu.pipeline_mode<synchronous>, transform_indices = @transform_4, window_bounds = array<i64: 1, 8>}, {pipeline_mode = #tpu.pipeline_mode<synchronous>, transform_indices = @transform_5, window_bounds = array<i64: 1, 8>}, {pipeline_mode = #tpu.pipeline_mode<synchronous>, transform_indices = @transform_6, window_bounds = array<i64: 72, 8>}, {pipeline_mode = #tpu.pipeline_mode<synchronous>, transform_indices = @transform_7, window_bounds = array<i64: 1, 8>}, {pipeline_mode = #tpu.pipeline_mode<synchronous>, transform_indices = @transform_8, window_bounds = array<i64: 1, 8>}, {transform_indices = @transform_9, window_bounds = array<i64: 1, 4, 128>}]} {
    %c0 = arith.constant 0 : index
    %c0_0 = arith.constant 0 : index
    %c0_1 = arith.constant 0 : index
    %c0_2 = arith.constant 0 : index
    %0 = vector.load %arg1[%c0, %c0_0, %c0_1, %c0_2] : memref<1x16x8x8xf32, #tpu.memory_space<vmem>>, vector<1x16x8x8xf32>
    %1 = vector.shape_cast %0 : vector<1x16x8x8xf32> to vector<16x8x8xf32>
    %2 = vector.shape_cast %1 : vector<16x8x8xf32> to vector<8x2x8x8xf32>
    %cst = arith.constant dense<0xFF800000> : vector<8x8x8xf32>
    %3 = vector.multi_reduction <maximumf>, %2, %cst [1] : vector<8x2x8x8xf32> to vector<8x8x8xf32>
    %4 = vector.extract_strided_slice %3 {offsets = [0, 0, 0], sizes = [8, 8, 4], strides = [1, 1, 1]} : vector<8x8x8xf32> to vector<8x8x4xf32>
    %5 = vector.extract_strided_slice %3 {offsets = [0, 0, 4], sizes = [8, 8, 4], strides = [1, 1, 1]} : vector<8x8x8xf32> to vector<8x8x4xf32>
    %6 = arith.maximumf %4, %5 : vector<8x8x4xf32>
    %7 = vector.shape_cast %6 : vector<8x8x4xf32> to vector<64x4xf32>
    %8 = arith.truncf %7 : vector<64x4xf32> to vector<64x4xbf16>
    %c0_3 = arith.constant 0 : index
    %c0_4 = arith.constant 0 : index
    %9 = vector.load %arg2[%c0_3, %c0_4] : memref<4x8xbf16, #tpu.memory_space<vmem>>, vector<4x8xbf16>
    %cst_5 = arith.constant dense<0.000000e+00> : vector<64x8xf32>
    %10 = tpu.matmul %8, %9, %cst_5 {dimension_numbers = #tpu.dot_dimension_numbers<[1], [0], [0], [1], [0, 0, 1, 1], [], []>} : vector<64x4xbf16>, vector<4x8xbf16>, vector<64x8xf32> -> vector<64x8xf32>
    %c0_6 = arith.constant 0 : index
    %c0_7 = arith.constant 0 : index
    %11 = vector.load %arg3[%c0_6, %c0_7] : memref<1x8xf32, #tpu.memory_space<vmem>>, vector<1x8xf32>
    %12 = vector.broadcast %11 : vector<1x8xf32> to vector<64x8xf32>
    %13 = arith.addf %10, %12 : vector<64x8xf32>
    %cst_8 = arith.constant 0.000000e+00 : f32
    %14 = vector.broadcast %cst_8 : f32 to vector<1x10x8xf32>
    %c0_9 = arith.constant 0 : index
    %c0_10 = arith.constant 0 : index
    %c0_11 = arith.constant 0 : index
    %15 = vector.load %arg11[%c0_9, %c0_10, %c0_11] : memref<10x10x8xf32, #tpu.memory_space<vmem>>, vector<1x10x8xf32>
    tpu.vector_store %arg11[%c0_9, %c0_10, %c0_11], %14 {strides = array<i32>} : memref<10x10x8xf32, #tpu.memory_space<vmem>>, vector<1x10x8xf32>,
    %cst_12 = arith.constant 0.000000e+00 : f32
    %16 = vector.broadcast %cst_12 : f32 to vector<1x10x8xf32>
    %c9 = arith.constant 9 : index
    %c0_13 = arith.constant 0 : index
    %c0_14 = arith.constant 0 : index
    %17 = vector.load %arg11[%c9, %c0_13, %c0_14] : memref<10x10x8xf32, #tpu.memory_space<vmem>>, vector<1x10x8xf32>
    tpu.vector_store %arg11[%c9, %c0_13, %c0_14], %16 {strides = array<i32>} : memref<10x10x8xf32, #tpu.memory_space<vmem>>, vector<1x10x8xf32>,
    %cst_15 = arith.constant 0.000000e+00 : f32
    %18 = vector.broadcast %cst_15 : f32 to vector<10x1x8xf32>
    %c0_16 = arith.constant 0 : index
    %c0_17 = arith.constant 0 : index
    %c0_18 = arith.constant 0 : index
    %19 = vector.load %arg11[%c0_16, %c0_17, %c0_18] : memref<10x10x8xf32, #tpu.memory_space<vmem>>, vector<10x1x8xf32>
    tpu.vector_store %arg11[%c0_16, %c0_17, %c0_18], %18 {strides = array<i32>} : memref<10x10x8xf32, #tpu.memory_space<vmem>>, vector<10x1x8xf32>,
    %cst_19 = arith.constant 0.000000e+00 : f32
    %20 = vector.broadcast %cst_19 : f32 to vector<10x1x8xf32>
    %c0_20 = arith.constant 0 : index
    %c9_21 = arith.constant 9 : index
    %c0_22 = arith.constant 0 : index
    %21 = vector.load %arg11[%c0_20, %c9_21, %c0_22] : memref<10x10x8xf32, #tpu.memory_space<vmem>>, vector<10x1x8xf32>
    tpu.vector_store %arg11[%c0_20, %c9_21, %c0_22], %20 {strides = array<i32>} : memref<10x10x8xf32, #tpu.memory_space<vmem>>, vector<10x1x8xf32>,
    %22 = vector.shape_cast %13 : vector<64x8xf32> to vector<8x8x8xf32>
    %c1 = arith.constant 1 : index
    %c1_23 = arith.constant 1 : index
    %c0_24 = arith.constant 0 : index
    %23 = vector.load %arg11[%c1, %c1_23, %c0_24] : memref<10x10x8xf32, #tpu.memory_space<vmem>>, vector<8x8x8xf32>
    tpu.vector_store %arg11[%c1, %c1_23, %c0_24], %22 {strides = array<i32>} : memref<10x10x8xf32, #tpu.memory_space<vmem>>, vector<8x8x8xf32>,
    %c0_25 = arith.constant 0 : index
    %c0_26 = arith.constant 0 : index
    %c0_27 = arith.constant 0 : index
    %24 = vector.load %arg11[%c0_25, %c0_26, %c0_27] : memref<10x10x8xf32, #tpu.memory_space<vmem>>, vector<8x8x8xf32>
    %25 = vector.shape_cast %24 : vector<8x8x8xf32> to vector<64x8xf32>
    %c0_28 = arith.constant 0 : index
    %c1_29 = arith.constant 1 : index
    %c0_30 = arith.constant 0 : index
    %26 = vector.load %arg11[%c0_28, %c1_29, %c0_30] : memref<10x10x8xf32, #tpu.memory_space<vmem>>, vector<8x8x8xf32>
    %27 = vector.shape_cast %26 : vector<8x8x8xf32> to vector<64x8xf32>
    %c0_31 = arith.constant 0 : index
    %c2 = arith.constant 2 : index
    %c0_32 = arith.constant 0 : index
    %28 = vector.load %arg11[%c0_31, %c2, %c0_32] : memref<10x10x8xf32, #tpu.memory_space<vmem>>, vector<8x8x8xf32>
    %29 = vector.shape_cast %28 : vector<8x8x8xf32> to vector<64x8xf32>
    %c1_33 = arith.constant 1 : index
    %c0_34 = arith.constant 0 : index
    %c0_35 = arith.constant 0 : index
    %30 = vector.load %arg11[%c1_33, %c0_34, %c0_35] : memref<10x10x8xf32, #tpu.memory_space<vmem>>, vector<8x8x8xf32>
    %31 = vector.shape_cast %30 : vector<8x8x8xf32> to vector<64x8xf32>
    %c1_36 = arith.constant 1 : index
    %c1_37 = arith.constant 1 : index
    %c0_38 = arith.constant 0 : index
    %32 = vector.load %arg11[%c1_36, %c1_37, %c0_38] : memref<10x10x8xf32, #tpu.memory_space<vmem>>, vector<8x8x8xf32>
    %33 = vector.shape_cast %32 : vector<8x8x8xf32> to vector<64x8xf32>
    %c1_39 = arith.constant 1 : index
    %c2_40 = arith.constant 2 : index
    %c0_41 = arith.constant 0 : index
    %34 = vector.load %arg11[%c1_39, %c2_40, %c0_41] : memref<10x10x8xf32, #tpu.memory_space<vmem>>, vector<8x8x8xf32>
    %35 = vector.shape_cast %34 : vector<8x8x8xf32> to vector<64x8xf32>
    %c2_42 = arith.constant 2 : index
    %c0_43 = arith.constant 0 : index
    %c0_44 = arith.constant 0 : index
    %36 = vector.load %arg11[%c2_42, %c0_43, %c0_44] : memref<10x10x8xf32, #tpu.memory_space<vmem>>, vector<8x8x8xf32>
    %37 = vector.shape_cast %36 : vector<8x8x8xf32> to vector<64x8xf32>
    %c2_45 = arith.constant 2 : index
    %c1_46 = arith.constant 1 : index
    %c0_47 = arith.constant 0 : index
    %38 = vector.load %arg11[%c2_45, %c1_46, %c0_47] : memref<10x10x8xf32, #tpu.memory_space<vmem>>, vector<8x8x8xf32>
    %39 = vector.shape_cast %38 : vector<8x8x8xf32> to vector<64x8xf32>
    %c2_48 = arith.constant 2 : index
    %c2_49 = arith.constant 2 : index
    %c0_50 = arith.constant 0 : index
    %40 = vector.load %arg11[%c2_48, %c2_49, %c0_50] : memref<10x10x8xf32, #tpu.memory_space<vmem>>, vector<8x8x8xf32>
    %41 = vector.shape_cast %40 : vector<8x8x8xf32> to vector<64x8xf32>
    %42 = tpu.concatenate %25, %27, %29, %31, %33, %35, %37, %39, %41 in 1 : vector<64x8xf32>, vector<64x8xf32>, vector<64x8xf32>, vector<64x8xf32>, vector<64x8xf32>, vector<64x8xf32>, vector<64x8xf32>, vector<64x8xf32>, vector<64x8xf32> -> vector<64x72xf32>
    %43 = arith.truncf %42 : vector<64x72xf32> to vector<64x72xbf16>
    %c0_51 = arith.constant 0 : index
    %c0_52 = arith.constant 0 : index
    %44 = vector.load %arg4[%c0_51, %c0_52] : memref<72x8xbf16, #tpu.memory_space<vmem>>, vector<72x8xbf16>
    %cst_53 = arith.constant dense<0.000000e+00> : vector<64x8xf32>
    %45 = tpu.matmul %43, %44, %cst_53 {dimension_numbers = #tpu.dot_dimension_numbers<[1], [0], [0], [1], [0, 0, 1, 1], [], []>} : vector<64x72xbf16>, vector<72x8xbf16>, vector<64x8xf32> -> vector<64x8xf32>
    %c0_54 = arith.constant 0 : index
    %c0_55 = arith.constant 0 : index
    %46 = vector.load %arg5[%c0_54, %c0_55] : memref<1x8xf32, #tpu.memory_space<vmem>>, vector<1x8xf32>
    %47 = vector.broadcast %46 : vector<1x8xf32> to vector<64x8xf32>
    %48 = arith.mulf %45, %47 : vector<64x8xf32>
    %c0_56 = arith.constant 0 : index
    %c0_57 = arith.constant 0 : index
    %49 = vector.load %arg6[%c0_56, %c0_57] : memref<1x8xf32, #tpu.memory_space<vmem>>, vector<1x8xf32>
    %50 = vector.broadcast %49 : vector<1x8xf32> to vector<64x8xf32>
    %51 = arith.addf %48, %50 : vector<64x8xf32>
    %cst_58 = arith.constant 0.000000e+00 : f32
    %52 = vector.broadcast %cst_58 : f32 to vector<64x8xf32>
    %53 = arith.maximumf %51, %52 : vector<64x8xf32>
    %54 = vector.shape_cast %53 : vector<64x8xf32> to vector<8x8x8xf32>
    %c1_59 = arith.constant 1 : index
    %c1_60 = arith.constant 1 : index
    %c0_61 = arith.constant 0 : index
    %55 = vector.load %arg11[%c1_59, %c1_60, %c0_61] : memref<10x10x8xf32, #tpu.memory_space<vmem>>, vector<8x8x8xf32>
    tpu.vector_store %arg11[%c1_59, %c1_60, %c0_61], %54 {strides = array<i32>} : memref<10x10x8xf32, #tpu.memory_space<vmem>>, vector<8x8x8xf32>,
    %c0_62 = arith.constant 0 : index
    %c0_63 = arith.constant 0 : index
    %c0_64 = arith.constant 0 : index
    %56 = vector.load %arg11[%c0_62, %c0_63, %c0_64] : memref<10x10x8xf32, #tpu.memory_space<vmem>>, vector<8x8x8xf32>
    %57 = vector.shape_cast %56 : vector<8x8x8xf32> to vector<64x8xf32>
    %c0_65 = arith.constant 0 : index
    %c1_66 = arith.constant 1 : index
    %c0_67 = arith.constant 0 : index
    %58 = vector.load %arg11[%c0_65, %c1_66, %c0_67] : memref<10x10x8xf32, #tpu.memory_space<vmem>>, vector<8x8x8xf32>
    %59 = vector.shape_cast %58 : vector<8x8x8xf32> to vector<64x8xf32>
    %c0_68 = arith.constant 0 : index
    %c2_69 = arith.constant 2 : index
    %c0_70 = arith.constant 0 : index
    %60 = vector.load %arg11[%c0_68, %c2_69, %c0_70] : memref<10x10x8xf32, #tpu.memory_space<vmem>>, vector<8x8x8xf32>
    %61 = vector.shape_cast %60 : vector<8x8x8xf32> to vector<64x8xf32>
    %c1_71 = arith.constant 1 : index
    %c0_72 = arith.constant 0 : index
    %c0_73 = arith.constant 0 : index
    %62 = vector.load %arg11[%c1_71, %c0_72, %c0_73] : memref<10x10x8xf32, #tpu.memory_space<vmem>>, vector<8x8x8xf32>
    %63 = vector.shape_cast %62 : vector<8x8x8xf32> to vector<64x8xf32>
    %c1_74 = arith.constant 1 : index
    %c1_75 = arith.constant 1 : index
    %c0_76 = arith.constant 0 : index
    %64 = vector.load %arg11[%c1_74, %c1_75, %c0_76] : memref<10x10x8xf32, #tpu.memory_space<vmem>>, vector<8x8x8xf32>
    %65 = vector.shape_cast %64 : vector<8x8x8xf32> to vector<64x8xf32>
    %c1_77 = arith.constant 1 : index
    %c2_78 = arith.constant 2 : index
    %c0_79 = arith.constant 0 : index
    %66 = vector.load %arg11[%c1_77, %c2_78, %c0_79] : memref<10x10x8xf32, #tpu.memory_space<vmem>>, vector<8x8x8xf32>
    %67 = vector.shape_cast %66 : vector<8x8x8xf32> to vector<64x8xf32>
    %c2_80 = arith.constant 2 : index
    %c0_81 = arith.constant 0 : index
    %c0_82 = arith.constant 0 : index
    %68 = vector.load %arg11[%c2_80, %c0_81, %c0_82] : memref<10x10x8xf32, #tpu.memory_space<vmem>>, vector<8x8x8xf32>
    %69 = vector.shape_cast %68 : vector<8x8x8xf32> to vector<64x8xf32>
    %c2_83 = arith.constant 2 : index
    %c1_84 = arith.constant 1 : index
    %c0_85 = arith.constant 0 : index
    %70 = vector.load %arg11[%c2_83, %c1_84, %c0_85] : memref<10x10x8xf32, #tpu.memory_space<vmem>>, vector<8x8x8xf32>
    %71 = vector.shape_cast %70 : vector<8x8x8xf32> to vector<64x8xf32>
    %c2_86 = arith.constant 2 : index
    %c2_87 = arith.constant 2 : index
    %c0_88 = arith.constant 0 : index
    %72 = vector.load %arg11[%c2_86, %c2_87, %c0_88] : memref<10x10x8xf32, #tpu.memory_space<vmem>>, vector<8x8x8xf32>
    %73 = vector.shape_cast %72 : vector<8x8x8xf32> to vector<64x8xf32>
    %74 = tpu.concatenate %57, %59, %61, %63, %65, %67, %69, %71, %73 in 1 : vector<64x8xf32>, vector<64x8xf32>, vector<64x8xf32>, vector<64x8xf32>, vector<64x8xf32>, vector<64x8xf32>, vector<64x8xf32>, vector<64x8xf32>, vector<64x8xf32> -> vector<64x72xf32>
    %75 = arith.truncf %74 : vector<64x72xf32> to vector<64x72xbf16>
    %c0_89 = arith.constant 0 : index
    %c0_90 = arith.constant 0 : index
    %76 = vector.load %arg7[%c0_89, %c0_90] : memref<72x8xbf16, #tpu.memory_space<vmem>>, vector<72x8xbf16>
    %cst_91 = arith.constant dense<0.000000e+00> : vector<64x8xf32>
    %77 = tpu.matmul %75, %76, %cst_91 {dimension_numbers = #tpu.dot_dimension_numbers<[1], [0], [0], [1], [0, 0, 1, 1], [], []>} : vector<64x72xbf16>, vector<72x8xbf16>, vector<64x8xf32> -> vector<64x8xf32>
    %c0_92 = arith.constant 0 : index
    %c0_93 = arith.constant 0 : index
    %78 = vector.load %arg8[%c0_92, %c0_93] : memref<1x8xf32, #tpu.memory_space<vmem>>, vector<1x8xf32>
    %79 = vector.broadcast %78 : vector<1x8xf32> to vector<64x8xf32>
    %80 = arith.mulf %77, %79 : vector<64x8xf32>
    %c0_94 = arith.constant 0 : index
    %c0_95 = arith.constant 0 : index
    %81 = vector.load %arg9[%c0_94, %c0_95] : memref<1x8xf32, #tpu.memory_space<vmem>>, vector<1x8xf32>
    %82 = vector.broadcast %81 : vector<1x8xf32> to vector<64x8xf32>
    %83 = arith.addf %80, %82 : vector<64x8xf32>
    %84 = arith.addf %83, %13 : vector<64x8xf32>
    %cst_96 = arith.constant 0.000000e+00 : f32
    %85 = vector.broadcast %cst_96 : f32 to vector<64x8xf32>
    %86 = arith.maximumf %84, %85 : vector<64x8xf32>
    %87 = tpu.iota {dimensions = array<i32: 0>} : vector<4x8xi32>
    %88 = tpu.iota {dimensions = array<i32: 1>} : vector<4x8xi32>
    %c2_i32 = arith.constant 2 : i32
    %89 = vector.broadcast %c2_i32 : i32 to vector<4x8xi32>
    %90 = arith.muli %89, %87 : vector<4x8xi32>
    %c0_i32 = arith.constant 0 : i32
    %91 = vector.broadcast %c0_i32 : i32 to vector<4x8xi32>
    %92 = arith.addi %90, %91 : vector<4x8xi32>
    %93 = arith.cmpi eq, %88, %92 : vector<4x8xi32>
    %94 = arith.extui %93 : vector<4x8xi1> to vector<4x8xi32>
    %95 = arith.sitofp %94 : vector<4x8xi32> to vector<4x8xf32>
    %cst_97 = arith.constant dense<0.000000e+00> : vector<4x64xf32>
    %96 = tpu.matmul %95, %86, %cst_97 {dimension_numbers = #tpu.dot_dimension_numbers<[1], [1], [0], [0], [0, 0, 1, 0], [], []>} : vector<4x8xf32>, vector<64x8xf32>, vector<4x64xf32> -> vector<4x64xf32>
    %c2_i32_98 = arith.constant 2 : i32
    %97 = vector.broadcast %c2_i32_98 : i32 to vector<4x8xi32>
    %98 = arith.muli %97, %87 : vector<4x8xi32>
    %c1_i32 = arith.constant 1 : i32
    %99 = vector.broadcast %c1_i32 : i32 to vector<4x8xi32>
    %100 = arith.addi %98, %99 : vector<4x8xi32>
    %101 = arith.cmpi eq, %88, %100 : vector<4x8xi32>
    %102 = arith.extui %101 : vector<4x8xi1> to vector<4x8xi32>
    %103 = arith.sitofp %102 : vector<4x8xi32> to vector<4x8xf32>
    %cst_99 = arith.constant dense<0.000000e+00> : vector<4x64xf32>
    %104 = tpu.matmul %103, %86, %cst_99 {dimension_numbers = #tpu.dot_dimension_numbers<[1], [1], [0], [0], [0, 0, 1, 0], [], []>} : vector<4x8xf32>, vector<64x8xf32>, vector<4x64xf32> -> vector<4x64xf32>
    %105 = tpu.concatenate %96, %104 in 1 : vector<4x64xf32>, vector<4x64xf32> -> vector<4x128xf32>
    %c0_100 = arith.constant 0 : index
    %c0_101 = arith.constant 0 : index
    %c0_102 = arith.constant 0 : index
    %106 = vector.load %arg10[%c0_100, %c0_101, %c0_102] : memref<1x4x128xf32, #tpu.memory_space<vmem>>, vector<1x4x128xf32>
    %107 = vector.shape_cast %106 : vector<1x4x128xf32> to vector<4x128xf32>
    %108 = vector.shape_cast %105 : vector<4x128xf32> to vector<1x4x128xf32>
    tpu.vector_store %arg10[%c0_100, %c0_101, %c0_102], %108 {strides = array<i32>} : memref<1x4x128xf32, #tpu.memory_space<vmem>>, vector<1x4x128xf32>,
    return
  }
  func.func @transform_0(%arg0: i32) -> (i32, i32, i32, i32) {
    %c0_i32 = arith.constant 0 : i32
    %c0_i32_0 = arith.constant 0 : i32
    %c0_i32_1 = arith.constant 0 : i32
    %c0_i32_2 = arith.constant 0 : i32
    return %arg0, %c0_i32, %c0_i32_0, %c0_i32_1 : i32, i32, i32, i32
  }
  func.func @transform_1(%arg0: i32) -> (i32, i32) {
    %c0_i32 = arith.constant 0 : i32
    %c0_i32_0 = arith.constant 0 : i32
    %c0_i32_1 = arith.constant 0 : i32
    return %c0_i32, %c0_i32_0 : i32, i32
  }
  func.func @transform_2(%arg0: i32) -> (i32, i32) {
    %c0_i32 = arith.constant 0 : i32
    %c0_i32_0 = arith.constant 0 : i32
    %c0_i32_1 = arith.constant 0 : i32
    return %c0_i32, %c0_i32_0 : i32, i32
  }
  func.func @transform_3(%arg0: i32) -> (i32, i32) {
    %c0_i32 = arith.constant 0 : i32
    %c0_i32_0 = arith.constant 0 : i32
    %c0_i32_1 = arith.constant 0 : i32
    return %c0_i32, %c0_i32_0 : i32, i32
  }
  func.func @transform_4(%arg0: i32) -> (i32, i32) {
    %c0_i32 = arith.constant 0 : i32
    %c0_i32_0 = arith.constant 0 : i32
    %c0_i32_1 = arith.constant 0 : i32
    return %c0_i32, %c0_i32_0 : i32, i32
  }
  func.func @transform_5(%arg0: i32) -> (i32, i32) {
    %c0_i32 = arith.constant 0 : i32
    %c0_i32_0 = arith.constant 0 : i32
    %c0_i32_1 = arith.constant 0 : i32
    return %c0_i32, %c0_i32_0 : i32, i32
  }
  func.func @transform_6(%arg0: i32) -> (i32, i32) {
    %c0_i32 = arith.constant 0 : i32
    %c0_i32_0 = arith.constant 0 : i32
    %c0_i32_1 = arith.constant 0 : i32
    return %c0_i32, %c0_i32_0 : i32, i32
  }
  func.func @transform_7(%arg0: i32) -> (i32, i32) {
    %c0_i32 = arith.constant 0 : i32
    %c0_i32_0 = arith.constant 0 : i32
    %c0_i32_1 = arith.constant 0 : i32
    return %c0_i32, %c0_i32_0 : i32, i32
  }
  func.func @transform_8(%arg0: i32) -> (i32, i32) {
    %c0_i32 = arith.constant 0 : i32
    %c0_i32_0 = arith.constant 0 : i32
    %c0_i32_1 = arith.constant 0 : i32
    return %c0_i32, %c0_i32_0 : i32, i32
  }
  func.func @transform_9(%arg0: i32) -> (i32, i32, i32) {
    %c0_i32 = arith.constant 0 : i32
    %c0_i32_0 = arith.constant 0 : i32
    %c0_i32_1 = arith.constant 0 : i32
    return %arg0, %c0_i32, %c0_i32_0 : i32, i32, i32
  }
}

</mosaic_0001>

<llo_original>
// kernel: tpu_custom_call.1
$region0: #{tpu_custom_call.1}
  #allocation0 [shape = 'u32[]', space=smem, size = 0x4, offset = 0x4, fixed_abs, tag = 'smem constant byte address 0x4 - core index']
  #allocation1 [shape = 'u32[144,128]{1,0:T(1,128)}', space=vmem, size = 0x12000, scoped, tag = 'internal scratch']
  #allocation2 [shape = 'f32[10,10,8]{2,1,0:T(8,128)}', space=vmem, size = 0x14000, scoped, tag = 'scratch operand']
  %s0 = inlined_call_operand.vmem [shape: f32[2,16,8,8], index: 0, kind: input, shape index: {}]
  %s1 = inlined_call_operand.vmem [shape: bf16[4,8], index: 1, kind: input, shape index: {}]
  %s2 = inlined_call_operand.vmem [shape: f32[1,8], index: 2, kind: input, shape index: {}]
  %s3 = inlined_call_operand.vmem [shape: bf16[72,8], index: 3, kind: input, shape index: {}]
  %s4 = inlined_call_operand.vmem [shape: f32[1,8], index: 4, kind: input, shape index: {}]
  %s5 = inlined_call_operand.vmem [shape: f32[1,8], index: 5, kind: input, shape index: {}]
  %s6 = inlined_call_operand.vmem [shape: bf16[72,8], index: 6, kind: input, shape index: {}]
  %s7 = inlined_call_operand.vmem [shape: f32[1,8], index: 7, kind: input, shape index: {}]
  %s8 = inlined_call_operand.vmem [shape: f32[1,8], index: 8, kind: input, shape index: {}]
  %s9 = inlined_call_operand.hbm [shape: f32[2,4,128], index: 9, kind: output, shape index: {}]
  %s10 = sld [smem:[#allocation0]]
  $region69: #{tpu_custom_call.1} parent=0
    _
  %s12 = ssub.s32 1, %s10
  %s13 = scalar_select 0, %s12, %s10
  $region1: #{tpu_custom_call.1} parent=0
    #allocation3 [shape = 'u8[4096]{0}', space=vmem, size = 0x1000, scoped, tag = 'output window, operand 0']
    #allocation4 [shape = 's32[2]{0}', space=sflag, size = 0x8, scoped, tag = 'scoped memory for tpu_custom_call.1']
    %14 = vsyncpa [#allocation4], 0
    %s15 = scalar_lea.sflag [#allocation4], 1
    %16 = vsyncpa %s15, 0
    loop: start=0, step=1, limit=4
    $region2: #{tpu_custom_call.1} parent=1 // loop_pre_header
      _
    $region3: #{tpu_custom_call.1} parent=1 // loop_header
      %s18 = sphi 0, %s22
      %p19 = scmp.ge.s32.totalorder %s18, 4
      %s28 = sphi 0, %s30
      %s31 = sphi 0, %s28
      %s32 = sphi 0, %s31
      %s48 = sphi 0, %s32
      %s52 = sphi 0, %s52
      %s54 = sphi 0, %s52
      %s55 = sphi 0, %s54
      %s69 = sphi 0, %s55
      %s73 = sphi 0, %s73
      %s75 = sphi 0, %s73
      %s76 = sphi 0, %s75
      %s90 = sphi 0, %s76
      %s94 = sphi 0, %s94
      %s96 = sphi 0, %s94
      %s97 = sphi 0, %s96
      %s111 = sphi 0, %s97
      %s115 = sphi 0, %s115
      %s117 = sphi 0, %s115
      %s118 = sphi 0, %s117
      %s132 = sphi 0, %s118
      %s136 = sphi 0, %s136
      %s138 = sphi 0, %s136
      %s139 = sphi 0, %s138
      %s153 = sphi 0, %s139
      %s157 = sphi 0, %s157
      %s159 = sphi 0, %s157
      %s160 = sphi 0, %s159
      %s174 = sphi 0, %s160
      %s178 = sphi 0, %s178
      %s180 = sphi 0, %s178
      %s181 = sphi 0, %s180
      %s195 = sphi 0, %s181
      %s199 = sphi 0, %s199
      %s201 = sphi 0, %s199
      %s202 = sphi 0, %s201
      %s216 = sphi 0, %s202
      %s222 = sphi 0, %s224
      %s225 = sphi 0, %s222
      %s226 = sphi 0, %s225
      %s242 = sphi 0, %s226
    $region4: #{tpu_custom_call.1} parent=1 // loop_header_branch
      %21 = sbr.rel (%p19) target = $region8
    $region5: #{tpu_custom_call.1} parent=1 // loop_body
      %s23 = ssub.s32 %s18, 1
      %s24 = ssub.s32 %s18, 2
      %s25 = sadd.s32 %s18, 1
      %s26 = ssub.s32 %s18, %s25
      %p27 = scmp.eq.s32.totalorder %s26, 0
      %s29 = sadd.s32 %s28, 1
      %s30 = scalar_select %p27, %s28, %s29
      %p33 = pneg %p27
      %p34 = scmp.eq.s32.totalorder %s18, 1
      %p35 = por %p33, %p34
      %p36 = scmp.ne.s32.totalorder %s28, %s31
      %p37 = scmp.eq.s32.totalorder %s18, 0
      %p38 = por %p36, %p37
      %p39 = scmp.ne.s32.totalorder %s28, %s31
      %p40 = scmp.eq.s32.totalorder %s23, 1
      %p41 = por %p39, %p40
      %p42 = scmp.ne.s32.totalorder %s31, %s32
      %p43 = scmp.eq.s32.totalorder %s23, 0
      %p44 = por %p42, %p43
      %p45 = scmp.ne.s32.totalorder %s31, %s32
      %p46 = scmp.eq.s32.totalorder %s24, 1
      %p47 = por %p45, %p46
      %p49 = scmp.ne.s32.totalorder %s32, %s48
      %p50 = scmp.eq.s32.totalorder %s24, 0
      %p51 = por %p49, %p50
      %s53 = sadd.s32 %s52, 1
      %p56 = scmp.eq.s32.totalorder %s18, 1
      %p57 = scmp.ne.s32.totalorder %s52, %s54
      %p58 = scmp.eq.s32.totalorder %s18, 0
      %p59 = por %p57, %p58
      %p60 = scmp.ne.s32.totalorder %s52, %s54
      %p61 = scmp.eq.s32.totalorder %s23, 1
      %p62 = por %p60, %p61
      %p63 = scmp.ne.s32.totalorder %s54, %s55
      %p64 = scmp.eq.s32.totalorder %s23, 0
      %p65 = por %p63, %p64
      %p66 = scmp.ne.s32.totalorder %s54, %s55
      %p67 = scmp.eq.s32.totalorder %s24, 1
      %p68 = por %p66, %p67
      %p70 = scmp.ne.s32.totalorder %s55, %s69
      %p71 = scmp.eq.s32.totalorder %s24, 0
      %p72 = por %p70, %p71
      %s74 = sadd.s32 %s73, 1
      %p77 = scmp.eq.s32.totalorder %s18, 1
      %p78 = scmp.ne.s32.totalorder %s73, %s75
      %p79 = scmp.eq.s32.totalorder %s18, 0
      %p80 = por %p78, %p79
      %p81 = scmp.ne.s32.totalorder %s73, %s75
      %p82 = scmp.eq.s32.totalorder %s23, 1
      %p83 = por %p81, %p82
      %p84 = scmp.ne.s32.totalorder %s75, %s76
      %p85 = scmp.eq.s32.totalorder %s23, 0
      %p86 = por %p84, %p85
      %p87 = scmp.ne.s32.totalorder %s75, %s76
      %p88 = scmp.eq.s32.totalorder %s24, 1
      %p89 = por %p87, %p88
      %p91 = scmp.ne.s32.totalorder %s76, %s90
      %p92 = scmp.eq.s32.totalorder %s24, 0
      %p93 = por %p91, %p92
      %s95 = sadd.s32 %s94, 1
      %p98 = scmp.eq.s32.totalorder %s18, 1
      %p99 = scmp.ne.s32.totalorder %s94, %s96
      %p100 = scmp.eq.s32.totalorder %s18, 0
      %p101 = por %p99, %p100
      %p102 = scmp.ne.s32.totalorder %s94, %s96
      %p103 = scmp.eq.s32.totalorder %s23, 1
      %p104 = por %p102, %p103
      %p105 = scmp.ne.s32.totalorder %s96, %s97
      %p106 = scmp.eq.s32.totalorder %s23, 0
      %p107 = por %p105, %p106
      %p108 = scmp.ne.s32.totalorder %s96, %s97
      %p109 = scmp.eq.s32.totalorder %s24, 1
      %p110 = por %p108, %p109
      %p112 = scmp.ne.s32.totalorder %s97, %s111
      %p113 = scmp.eq.s32.totalorder %s24, 0
      %p114 = por %p112, %p113
      %s116 = sadd.s32 %s115, 1
      %p119 = scmp.eq.s32.totalorder %s18, 1
      %p120 = scmp.ne.s32.totalorder %s115, %s117
      %p121 = scmp.eq.s32.totalorder %s18, 0
      %p122 = por %p120, %p121
      %p123 = scmp.ne.s32.totalorder %s115, %s117
      %p124 = scmp.eq.s32.totalorder %s23, 1
      %p125 = por %p123, %p124
      %p126 = scmp.ne.s32.totalorder %s117, %s118
      %p127 = scmp.eq.s32.totalorder %s23, 0
      %p128 = por %p126, %p127
      %p129 = scmp.ne.s32.totalorder %s117, %s118
      %p130 = scmp.eq.s32.totalorder %s24, 1
      %p131 = por %p129, %p130
      %p133 = scmp.ne.s32.totalorder %s118, %s132
      %p134 = scmp.eq.s32.totalorder %s24, 0
      %p135 = por %p133, %p134
      %s137 = sadd.s32 %s136, 1
      %p140 = scmp.eq.s32.totalorder %s18, 1
      %p141 = scmp.ne.s32.totalorder %s136, %s138
      %p142 = scmp.eq.s32.totalorder %s18, 0
      %p143 = por %p141, %p142
      %p144 = scmp.ne.s32.totalorder %s136, %s138
      %p145 = scmp.eq.s32.totalorder %s23, 1
      %p146 = por %p144, %p145
      %p147 = scmp.ne.s32.totalorder %s138, %s139
      %p148 = scmp.eq.s32.totalorder %s23, 0
      %p149 = por %p147, %p148
      %p150 = scmp.ne.s32.totalorder %s138, %s139
      %p151 = scmp.eq.s32.totalorder %s24, 1
      %p152 = por %p150, %p151
      %p154 = scmp.ne.s32.totalorder %s139, %s153
      %p155 = scmp.eq.s32.totalorder %s24, 0
      %p156 = por %p154, %p155
      %s158 = sadd.s32 %s157, 1
      %p161 = scmp.eq.s32.totalorder %s18, 1
      %p162 = scmp.ne.s32.totalorder %s157, %s159
      %p163 = scmp.eq.s32.totalorder %s18, 0
      %p164 = por %p162, %p163
      %p165 = scmp.ne.s32.totalorder %s157, %s159
      %p166 = scmp.eq.s32.totalorder %s23, 1
      %p167 = por %p165, %p166
      %p168 = scmp.ne.s32.totalorder %s159, %s160
      %p169 = scmp.eq.s32.totalorder %s23, 0
      %p170 = por %p168, %p169
      %p171 = scmp.ne.s32.totalorder %s159, %s160
      %p172 = scmp.eq.s32.totalorder %s24, 1
      %p173 = por %p171, %p172
      %p175 = scmp.ne.s32.totalorder %s160, %s174
      %p176 = scmp.eq.s32.totalorder %s24, 0
      %p177 = por %p175, %p176
      %s179 = sadd.s32 %s178, 1
      %p182 = scmp.eq.s32.totalorder %s18, 1
      %p183 = scmp.ne.s32.totalorder %s178, %s180
      %p184 = scmp.eq.s32.totalorder %s18, 0
      %p185 = por %p183, %p184
      %p186 = scmp.ne.s32.totalorder %s178, %s180
      %p187 = scmp.eq.s32.totalorder %s23, 1
      %p188 = por %p186, %p187
      %p189 = scmp.ne.s32.totalorder %s180, %s181
      %p190 = scmp.eq.s32.totalorder %s23, 0
      %p191 = por %p189, %p190
      %p192 = scmp.ne.s32.totalorder %s180, %s181
      %p193 = scmp.eq.s32.totalorder %s24, 1
      %p194 = por %p192, %p193
      %p196 = scmp.ne.s32.totalorder %s181, %s195
      %p197 = scmp.eq.s32.totalorder %s24, 0
      %p198 = por %p196, %p197
      %s200 = sadd.s32 %s199, 1
      %p203 = scmp.eq.s32.totalorder %s18, 1
      %p204 = scmp.ne.s32.totalorder %s199, %s201
      %p205 = scmp.eq.s32.totalorder %s18, 0
      %p206 = por %p204, %p205
      %p207 = scmp.ne.s32.totalorder %s199, %s201
      %p208 = scmp.eq.s32.totalorder %s23, 1
      %p209 = por %p207, %p208
      %p210 = scmp.ne.s32.totalorder %s201, %s202
      %p211 = scmp.eq.s32.totalorder %s23, 0
      %p212 = por %p210, %p211
      %p213 = scmp.ne.s32.totalorder %s201, %s202
      %p214 = scmp.eq.s32.totalorder %s24, 1
      %p215 = por %p213, %p214
      %p217 = scmp.ne.s32.totalorder %s202, %s216
      %p218 = scmp.eq.s32.totalorder %s24, 0
      %p219 = por %p217, %p218
      %s220 = ssub.s32 %s18, %s25
      %p221 = scmp.eq.s32.totalorder %s220, 0
      %s223 = sadd.s32 %s222, 1
      %s224 = scalar_select %p221, %s222, %s223
      %p227 = pneg %p221
      %p228 = scmp.eq.s32.totalorder %s18, 1
      %p229 = por %p227, %p228
      %p230 = scmp.ne.s32.totalorder %s222, %s225
      %p231 = scmp.eq.s32.totalorder %s18, 0
      %p232 = por %p230, %p231
      %p233 = scmp.ne.s32.totalorder %s222, %s225
      %p234 = scmp.eq.s32.totalorder %s23, 1
      %p235 = por %p233, %p234
      %p236 = scmp.ne.s32.totalorder %s225, %s226
      %p237 = scmp.eq.s32.totalorder %s23, 0
      %p238 = por %p236, %p237
      %p239 = scmp.ne.s32.totalorder %s225, %s226
      %p240 = scmp.eq.s32.totalorder %s24, 1
      %p241 = por %p239, %p240
      %p243 = scmp.ne.s32.totalorder %s226, %s242
      %p244 = scmp.eq.s32.totalorder %s24, 0
      %p245 = por %p243, %p244
      %p246 = scmp.le.s32.totalorder 1, %s18
      %p247 = scmp.lt.s32.totalorder %s18, 3
      %p248 = pnand %p246, %p247
      %p249 = pneg %p248
      // Predicated region
      $region9: #{tpu_custom_call.1} parent=5 // pred_check
        _
      $region10: #{tpu_custom_call.1} parent=5 // pred_check_branch
        %251 = sbr.rel (%p248) target = $region12
      $region11: #{tpu_custom_call.1} parent=5 // pred_region
        %s252 = ssub.s32 %s18, 1
        // Predicated region
        $region13: #{tpu_custom_call.1} parent=11 // pred_check
          %p253 = pneg %p65
        $region14: #{tpu_custom_call.1} parent=11 // pred_check_branch
          %255 = sbr.rel (%p253) target = $region16
        $region15: #{tpu_custom_call.1} parent=11 // pred_region
          _
        $region16: #{tpu_custom_call.1} parent=11 // pred_fallthru
          _
        // Predicated region
        $region17: #{tpu_custom_call.1} parent=11 // pred_check
          %p256 = pneg %p86
        $region18: #{tpu_custom_call.1} parent=11 // pred_check_branch
          %258 = sbr.rel (%p256) target = $region20
        $region19: #{tpu_custom_call.1} parent=11 // pred_region
          _
        $region20: #{tpu_custom_call.1} parent=11 // pred_fallthru
          _
        // Predicated region
        $region21: #{tpu_custom_call.1} parent=11 // pred_check
          %p259 = pneg %p107
        $region22: #{tpu_custom_call.1} parent=11 // pred_check_branch
          %261 = sbr.rel (%p259) target = $region24
        $region23: #{tpu_custom_call.1} parent=11 // pred_region
          _
        $region24: #{tpu_custom_call.1} parent=11 // pred_fallthru
          _
        // Predicated region
        $region25: #{tpu_custom_call.1} parent=11 // pred_check
          %p262 = pneg %p128
        $region26: #{tpu_custom_call.1} parent=11 // pred_check_branch
          %264 = sbr.rel (%p262) target = $region28
        $region27: #{tpu_custom_call.1} parent=11 // pred_region
          _
        $region28: #{tpu_custom_call.1} parent=11 // pred_fallthru
          _
        // Predicated region
        $region29: #{tpu_custom_call.1} parent=11 // pred_check
          %p265 = pneg %p149
        $region30: #{tpu_custom_call.1} parent=11 // pred_check_branch
          %267 = sbr.rel (%p265) target = $region32
        $region31: #{tpu_custom_call.1} parent=11 // pred_region
          _
        $region32: #{tpu_custom_call.1} parent=11 // pred_fallthru
          _
        // Predicated region
        $region33: #{tpu_custom_call.1} parent=11 // pred_check
          %p268 = pneg %p170
        $region34: #{tpu_custom_call.1} parent=11 // pred_check_branch
          %270 = sbr.rel (%p268) target = $region36
        $region35: #{tpu_custom_call.1} parent=11 // pred_region
          _
        $region36: #{tpu_custom_call.1} parent=11 // pred_fallthru
          _
        // Predicated region
        $region37: #{tpu_custom_call.1} parent=11 // pred_check
          %p271 = pneg %p191
        $region38: #{tpu_custom_call.1} parent=11 // pred_check_branch
          %273 = sbr.rel (%p271) target = $region40
        $region39: #{tpu_custom_call.1} parent=11 // pred_region
          _
        $region40: #{tpu_custom_call.1} parent=11 // pred_fallthru
          _
        // Predicated region
        $region41: #{tpu_custom_call.1} parent=11 // pred_check
          %p274 = pneg %p212
        $region42: #{tpu_custom_call.1} parent=11 // pred_check_branch
          %276 = sbr.rel (%p274) target = $region44
        $region43: #{tpu_custom_call.1} parent=11 // pred_region
          _
        $region44: #{tpu_custom_call.1} parent=11 // pred_fallthru
          _
      $region12: #{tpu_custom_call.1} parent=5 // pred_fallthru
        _
      %p277 = scmp.lt.s32.totalorder %s18, 2
      // Predicated region
      $region45: #{tpu_custom_call.1} parent=5 // pred_check
        %p278 = pneg %p277
      $region46: #{tpu_custom_call.1} parent=5 // pred_check_branch
        %280 = sbr.rel (%p278) target = $region48
      $region47: #{tpu_custom_call.1} parent=5 // pred_region
        // Predicated region
        $region49: #{tpu_custom_call.1} parent=47 // pred_check
          %p281 = pneg %p38
        $region50: #{tpu_custom_call.1} parent=47 // pred_check_branch
          %283 = sbr.rel (%p281) target = $region52
        $region51: #{tpu_custom_call.1} parent=47 // pred_region
          %p284 = scmp.lt.s32.totalorder %s18, 1
          %s285 = scalar_select %p284, %s18, 1
          %s286 = smul.addr %s285, 16
          %s287 = smul.addr %s286, 8
          %s288 = scalar_lea.vmem %s0, %s287
        $region52: #{tpu_custom_call.1} parent=47 // pred_fallthru
          _
      $region48: #{tpu_custom_call.1} parent=5 // pred_fallthru
        _
      %p289 = scmp.le.s32.totalorder 1, %s18
      %p290 = scmp.lt.s32.totalorder %s18, 3
      %p291 = pnand %p289, %p290
      %p292 = pneg %p291
      // Predicated region
      $region53: #{tpu_custom_call.1} parent=5 // pred_check
        _
      $region54: #{tpu_custom_call.1} parent=5 // pred_check_branch
        %294 = sbr.rel (%p291) target = $region56
      $region55: #{tpu_custom_call.1} parent=5 // pred_region
        %s295 = ssub.s32 %s18, 1
        %p296 = scmp.lt.s32.totalorder %s23, 1
        %s297 = scalar_select %p296, %s23, 1
        %s298 = smul.addr %s297, 16
        %s299 = smul.addr %s298, 8
        %s300 = scalar_lea.vmem %s0, %s299
        %p301 = pneg %p44
        %p302 = pneg %p41
        %p303 = pneg %p65
        %p304 = pneg %p62
        %p305 = pneg %p86
        %p306 = pneg %p83
        %p307 = pneg %p107
        %p308 = pneg %p104
        %p309 = pneg %p128
        %p310 = pneg %p125
        %p311 = pneg %p149
        %p312 = pneg %p146
        %p313 = pneg %p170
        %p314 = pneg %p167
        %p315 = pneg %p191
        %p316 = pneg %p188
        %p317 = pneg %p212
        %p318 = pneg %p209
        %p319 = pneg %p238
        %p320 = pneg %p235
        %s321 = sand.u32 %s225, 1
        %s322 = scalar_lea.sflag [#allocation4], %s321
        %s323 = sand.u32 %s225, 1
        %s324 = smul.addr %s323, 4
        %s325 = scalar_lea.vmem [#allocation3], %s324
        %p326 = scmp.lt.s32.totalorder %s23, 1
        %s327 = scalar_select %p326, %s23, 1
        %s328 = smul.addr %s327, 16
        %s329 = smul.addr %s328, 8
        %s330 = scalar_lea.vmem %s0, %s329
        %v332 = vld [vmem:[%s330] sm:$0xff]
        %v333 = vld [vmem:[%s330 + $0x8] sm:$0xff]
        %v334 = vld [vmem:[%s330 + $0x10] sm:$0xff]
        %v335 = vld [vmem:[%s330 + $0x18] sm:$0xff]
        %v336 = vld [vmem:[%s330 + $0x20] sm:$0xff]
        %v337 = vld [vmem:[%s330 + $0x28] sm:$0xff]
        %v338 = vld [vmem:[%s330 + $0x30] sm:$0xff]
        %v339 = vld [vmem:[%s330 + $0x38] sm:$0xff]
        %v340 = vld [vmem:[%s330 + $0x40] sm:$0xff]
        %v341 = vld [vmem:[%s330 + $0x48] sm:$0xff]
        %v342 = vld [vmem:[%s330 + $0x50] sm:$0xff]
        %v343 = vld [vmem:[%s330 + $0x58] sm:$0xff]
        %v344 = vld [vmem:[%s330 + $0x60] sm:$0xff]
        %v345 = vld [vmem:[%s330 + $0x68] sm:$0xff]
        %v346 = vld [vmem:[%s330 + $0x70] sm:$0xff]
        %v347 = vld [vmem:[%s330 + $0x78] sm:$0xff]
        %vm348 = vcmask 64512
        %v349 = vsel %vm348, %v332, -inf
        %v350 = vsel %vm348, %v333, -inf
        %v351 = vmax.f32 %v349, %v350
        %v352 = vsel %vm348, %v334, -inf
        %v353 = vsel %vm348, %v335, -inf
        %v354 = vmax.f32 %v352, %v353
        %v355 = vsel %vm348, %v336, -inf
        %v356 = vsel %vm348, %v337, -inf
        %v357 = vmax.f32 %v355, %v356
        %v358 = vsel %vm348, %v338, -inf
        %v359 = vsel %vm348, %v339, -inf
        %v360 = vmax.f32 %v358, %v359
        %v361 = vsel %vm348, %v340, -inf
        %v362 = vsel %vm348, %v341, -inf
        %v363 = vmax.f32 %v361, %v362
        %v364 = vsel %vm348, %v342, -inf
        %v365 = vsel %vm348, %v343, -inf
        %v366 = vmax.f32 %v364, %v365
        %v367 = vsel %vm348, %v344, -inf
        %v368 = vsel %vm348, %v345, -inf
        %v369 = vmax.f32 %v367, %v368
        %v370 = vsel %vm348, %v346, -inf
        %v371 = vsel %vm348, %v347, -inf
        %v372 = vmax.f32 %v370, %v371
        %381 = vrot.lane.b32.xlu0 %v351, 124
        %v382 = vpop.permute.xlu0 %381
        %383 = vrot.lane.b32.xlu0 %v354, 124
        %v384 = vpop.permute.xlu0 %383
        %385 = vrot.lane.b32.xlu0 %v357, 124
        %v386 = vpop.permute.xlu0 %385
        %387 = vrot.lane.b32.xlu0 %v360, 124
        %v388 = vpop.permute.xlu0 %387
        %389 = vrot.lane.b32.xlu0 %v363, 124
        %v390 = vpop.permute.xlu0 %389
        %391 = vrot.lane.b32.xlu0 %v366, 124
        %v392 = vpop.permute.xlu0 %391
        %393 = vrot.lane.b32.xlu0 %v369, 124
        %v394 = vpop.permute.xlu0 %393
        %395 = vrot.lane.b32.xlu0 %v372, 124
        %v396 = vpop.permute.xlu0 %395
        %v405 = vmax.f32 %v351, %v382
        %v406 = vmax.f32 %v354, %v384
        %v407 = vmax.f32 %v357, %v386
        %v408 = vmax.f32 %v360, %v388
        %v409 = vmax.f32 %v363, %v390
        %v410 = vmax.f32 %v366, %v392
        %v411 = vmax.f32 %v369, %v394
        %v412 = vmax.f32 %v372, %v396
        %v413 = vpack.c.bf16 %v406, %v405
        %v414 = vpack.c.bf16 %v408, %v407
        %v415 = vpack.c.bf16 %v410, %v409
        %v416 = vpack.c.bf16 %v412, %v411
        %v417 = vld [vmem:[%s1] sm:$0x3]
        %v418 = vld [vmem:[%s2] sm:$0x1]
        %v420 = vlaneseq
        %v421 = vshrl.u32 %v420, 7
        %v422 = vsub.s32 0, %v421
        %v423 = vrot.slane %v418, %v422
        %vm425 = vcmask 31744
        %v427 = vsel %vm425, %v413, 0
        %v430 = vsel %vm425, %v414, 0
        %v433 = vsel %vm425, %v415, 0
        %v436 = vsel %vm425, %v416, 0
        %vm438 = vcmask 1041408
        %v440 = vsel %vm438, %v417, 0
        %442 = vmatprep.subr.bf16.mxu0 0
        %443 = vmatpush1.bf16.msra.mxu0 %v440
        %444 = vmatprep.subr.bf16.mxu0 0
        %445 = vmatpush1.bf16.msra.mxu0 0
        %446 = vmatprep.subr.bf16.mxu0 0
        %447 = vmatpush1.bf16.msra.mxu0 0
        %448 = vmatprep.subr.bf16.mxu0 0
        %449 = vmatpush1.bf16.msra.mxu0 0
        %450 = vmatprep.subr.bf16.mxu0 0
        %451 = vmatpush1.bf16.msra.mxu0 0
        %452 = vmatprep.subr.bf16.mxu0 0
        %453 = vmatpush1.bf16.msra.mxu0 0
        %454 = vmatprep.subr.bf16.mxu0 0
        %455 = vmatpush1.bf16.msra.mxu0 0
        %456 = vmatprep.subr.bf16.mxu0 0
        %457 = vmatpush1.bf16.msra.mxu0 0
        %458 = vmatprep.subr.bf16.mxu0 0
        %459 = vmatpush1.bf16.msra.mxu0 0
        %460 = vmatprep.subr.bf16.mxu0 0
        %461 = vmatpush1.bf16.msra.mxu0 0
        %462 = vmatprep.subr.bf16.mxu0 0
        %463 = vmatpush1.bf16.msra.mxu0 0
        %464 = vmatprep.subr.bf16.mxu0 0
        %465 = vmatpush1.bf16.msra.mxu0 0
        %466 = vmatprep.subr.bf16.mxu0 0
        %467 = vmatpush1.bf16.msra.mxu0 0
        %468 = vmatprep.subr.bf16.mxu0 0
        %469 = vmatpush1.bf16.msra.mxu0 0
        %470 = vmatprep.subr.bf16.mxu0 0
        %471 = vmatpush1.bf16.msra.mxu0 0
        %472 = vmatprep.subr.bf16.mxu0 0
        %473 = vmatpush1.bf16.msra.mxu0 0
        %474 = vmatprep.mubr.bf16.mxu0 0
        %475 = vmatmul.mubr.bf16.gmra.mrb[0].mxu0 %v427
        %v476 = vpop.f32.mrb[0].mxu0
        %v477 = vadd.f32 %v423, %v476
        %v478 = vpop.f32.mrb[0].mxu0
        %v479 = vpop.f32.mrb[0].mxu0
        %v480 = vadd.f32 %v423, %v479
        %v481 = vpop.f32.mrb[0].mxu0
        %482 = vmatprep.mubr.bf16.mxu0 0
        %483 = vmatmul.mubr.bf16.gmra.mrb[0].mxu0 %v430
        %v484 = vpop.f32.mrb[0].mxu0
        %v485 = vadd.f32 %v423, %v484
        %v486 = vpop.f32.mrb[0].mxu0
        %v487 = vpop.f32.mrb[0].mxu0
        %v488 = vadd.f32 %v423, %v487
        %v489 = vpop.f32.mrb[0].mxu0
        %490 = vmatprep.mubr.bf16.mxu0 0
        %491 = vmatmul.mubr.bf16.gmra.mrb[0].mxu0 %v433
        %v492 = vpop.f32.mrb[0].mxu0
        %v493 = vadd.f32 %v423, %v492
        %v494 = vpop.f32.mrb[0].mxu0
        %v495 = vpop.f32.mrb[0].mxu0
        %v496 = vadd.f32 %v423, %v495
        %v497 = vpop.f32.mrb[0].mxu0
        %498 = vmatprep.mubr.bf16.mxu0 0
        %499 = vmatmul.mubr.bf16.gmra.mrb[0].mxu0 %v436
        %v500 = vpop.f32.mrb[0].mxu0
        %v501 = vadd.f32 %v423, %v500
        %v502 = vpop.f32.mrb[0].mxu0
        %v503 = vpop.f32.mrb[0].mxu0
        %v504 = vadd.f32 %v423, %v503
        %v505 = vpop.f32.mrb[0].mxu0
        %506 = vdwg.mxu0
        %507 = vst.msk [vmem:[#allocation2] sm:$0xff] %vm348, 0.0
        %vm508 = vcmask 58368
        %509 = vst.msk [vmem:[#allocation2 + $0x8] sm:$0x3] %vm508, 0.0
        %s510 = scalar_lea.vmem [#allocation2], 144
        %511 = vst.msk [vmem:[%s510] sm:$0xff] %vm348, 0.0
        %512 = vst.msk [vmem:[%s510 + $0x8] sm:$0x3] %vm508, 0.0
        %vm513 = vcmask 57344
        %514 = vst.msk [vmem:[#allocation2] sm:$0x1] %vm513, 0.0
        %515 = vst.msk [vmem:[#allocation2 + $0x10] sm:$0x1] %vm513, 0.0
        %516 = vst.msk [vmem:[#allocation2 + $0x20] sm:$0x1] %vm513, 0.0
        %517 = vst.msk [vmem:[#allocation2 + $0x30] sm:$0x1] %vm513, 0.0
        %518 = vst.msk [vmem:[#allocation2 + $0x40] sm:$0x1] %vm513, 0.0
        %519 = vst.msk [vmem:[#allocation2 + $0x50] sm:$0x1] %vm513, 0.0
        %520 = vst.msk [vmem:[#allocation2 + $0x60] sm:$0x1] %vm513, 0.0
        %521 = vst.msk [vmem:[#allocation2 + $0x70] sm:$0x1] %vm513, 0.0
        %522 = vst.msk [vmem:[#allocation2 + $0x80] sm:$0x1] %vm513, 0.0
        %523 = vst.msk [vmem:[#allocation2 + $0x90] sm:$0x1] %vm513, 0.0
        %524 = vst.msk [vmem:[#allocation2 + $0x9] sm:$0x1] %vm513, 0.0
        %525 = vst.msk [vmem:[#allocation2 + $0x19] sm:$0x1] %vm513, 0.0
        %526 = vst.msk [vmem:[#allocation2 + $0x29] sm:$0x1] %vm513, 0.0
        %527 = vst.msk [vmem:[#allocation2 + $0x39] sm:$0x1] %vm513, 0.0
        %528 = vst.msk [vmem:[#allocation2 + $0x49] sm:$0x1] %vm513, 0.0
        %529 = vst.msk [vmem:[#allocation2 + $0x59] sm:$0x1] %vm513, 0.0
        %530 = vst.msk [vmem:[#allocation2 + $0x69] sm:$0x1] %vm513, 0.0
        %531 = vst.msk [vmem:[#allocation2 + $0x79] sm:$0x1] %vm513, 0.0
        %532 = vst.msk [vmem:[#allocation2 + $0x89] sm:$0x1] %vm513, 0.0
        %533 = vst.msk [vmem:[#allocation2 + $0x99] sm:$0x1] %vm513, 0.0
        %s534 = scalar_lea.vmem [#allocation2], 16
        %535 = vst.msk [vmem:[%s534 + $0x1] sm:$0xff] %vm348, %v477
        %536 = vst.msk [vmem:[%s534 + $0x11] sm:$0xff] %vm348, %v480
        %537 = vst.msk [vmem:[%s534 + $0x21] sm:$0xff] %vm348, %v485
        %538 = vst.msk [vmem:[%s534 + $0x31] sm:$0xff] %vm348, %v488
        %539 = vst.msk [vmem:[%s534 + $0x41] sm:$0xff] %vm348, %v493
        %540 = vst.msk [vmem:[%s534 + $0x51] sm:$0xff] %vm348, %v496
        %541 = vst.msk [vmem:[%s534 + $0x61] sm:$0xff] %vm348, %v501
        %542 = vst.msk [vmem:[%s534 + $0x71] sm:$0xff] %vm348, %v504
        %v543 = vld [vmem:[#allocation2] sm:$0xff]
        %v544 = vld [vmem:[#allocation2 + $0x10] sm:$0xff]
        %v545 = vld [vmem:[#allocation2 + $0x20] sm:$0xff]
        %v546 = vld [vmem:[#allocation2 + $0x30] sm:$0xff]
        %v547 = vld [vmem:[#allocation2 + $0x40] sm:$0xff]
        %v548 = vld [vmem:[#allocation2 + $0x50] sm:$0xff]
        %v549 = vld [vmem:[#allocation2 + $0x60] sm:$0xff]
        %v550 = vld [vmem:[#allocation2 + $0x70] sm:$0xff]
        %v551 = vld [vmem:[#allocation2 + $0x1] sm:$0xff]
        %v552 = vld [vmem:[#allocation2 + $0x11] sm:$0xff]
        %v553 = vld [vmem:[#allocation2 + $0x21] sm:$0xff]
        %v554 = vld [vmem:[#allocation2 + $0x31] sm:$0xff]
        %v555 = vld [vmem:[#allocation2 + $0x41] sm:$0xff]
        %v556 = vld [vmem:[#allocation2 + $0x51] sm:$0xff]
        %v557 = vld [vmem:[#allocation2 + $0x61] sm:$0xff]
        %v558 = vld [vmem:[#allocation2 + $0x71] sm:$0xff]
        %v559 = vld [vmem:[#allocation2 + $0x2] sm:$0xff]
        %v560 = vld [vmem:[#allocation2 + $0x12] sm:$0xff]
        %v561 = vld [vmem:[#allocation2 + $0x22] sm:$0xff]
        %v562 = vld [vmem:[#allocation2 + $0x32] sm:$0xff]
        %v563 = vld [vmem:[#allocation2 + $0x42] sm:$0xff]
        %v564 = vld [vmem:[#allocation2 + $0x52] sm:$0xff]
        %v565 = vld [vmem:[#allocation2 + $0x62] sm:$0xff]
        %v566 = vld [vmem:[#allocation2 + $0x72] sm:$0xff]
        %v567 = vld [vmem:[%s534] sm:$0xff]
        %v568 = vld [vmem:[%s534 + $0x10] sm:$0xff]
        %v569 = vld [vmem:[%s534 + $0x20] sm:$0xff]
        %v570 = vld [vmem:[%s534 + $0x30] sm:$0xff]
        %v571 = vld [vmem:[%s534 + $0x40] sm:$0xff]
        %v572 = vld [vmem:[%s534 + $0x50] sm:$0xff]
        %v573 = vld [vmem:[%s534 + $0x60] sm:$0xff]
        %v574 = vld [vmem:[%s534 + $0x70] sm:$0xff]
        %v575 = vld [vmem:[%s534 + $0x1] sm:$0xff]
        %v576 = vld [vmem:[%s534 + $0x11] sm:$0xff]
        %v577 = vld [vmem:[%s534 + $0x21] sm:$0xff]
        %v578 = vld [vmem:[%s534 + $0x31] sm:$0xff]
        %v579 = vld [vmem:[%s534 + $0x41] sm:$0xff]
        %v580 = vld [vmem:[%s534 + $0x51] sm:$0xff]
        %v581 = vld [vmem:[%s534 + $0x61] sm:$0xff]
        %v582 = vld [vmem:[%s534 + $0x71] sm:$0xff]
        %v583 = vld [vmem:[%s534 + $0x2] sm:$0xff]
        %v584 = vld [vmem:[%s534 + $0x12] sm:$0xff]
        %v585 = vld [vmem:[%s534 + $0x22] sm:$0xff]
        %v586 = vld [vmem:[%s534 + $0x32] sm:$0xff]
        %v587 = vld [vmem:[%s534 + $0x42] sm:$0xff]
        %v588 = vld [vmem:[%s534 + $0x52] sm:$0xff]
        %v589 = vld [vmem:[%s534 + $0x62] sm:$0xff]
        %v590 = vld [vmem:[%s534 + $0x72] sm:$0xff]
        %s591 = scalar_lea.vmem [#allocation2], 32
        %v592 = vld [vmem:[%s591] sm:$0xff]
        %v593 = vld [vmem:[%s591 + $0x10] sm:$0xff]
        %v594 = vld [vmem:[%s591 + $0x20] sm:$0xff]
        %v595 = vld [vmem:[%s591 + $0x30] sm:$0xff]
        %v596 = vld [vmem:[%s591 + $0x40] sm:$0xff]
        %v597 = vld [vmem:[%s591 + $0x50] sm:$0xff]
        %v598 = vld [vmem:[%s591 + $0x60] sm:$0xff]
        %v599 = vld [vmem:[%s591 + $0x70] sm:$0xff]
        %v600 = vld [vmem:[%s591 + $0x1] sm:$0xff]
        %v601 = vld [vmem:[%s591 + $0x11] sm:$0xff]
        %v602 = vld [vmem:[%s591 + $0x21] sm:$0xff]
        %v603 = vld [vmem:[%s591 + $0x31] sm:$0xff]
        %v604 = vld [vmem:[%s591 + $0x41] sm:$0xff]
        %v605 = vld [vmem:[%s591 + $0x51] sm:$0xff]
        %v606 = vld [vmem:[%s591 + $0x61] sm:$0xff]
        %v607 = vld [vmem:[%s591 + $0x71] sm:$0xff]
        %v608 = vld [vmem:[%s591 + $0x2] sm:$0xff]
        %v609 = vld [vmem:[%s591 + $0x12] sm:$0xff]
        %v610 = vld [vmem:[%s591 + $0x22] sm:$0xff]
        %v611 = vld [vmem:[%s591 + $0x32] sm:$0xff]
        %v612 = vld [vmem:[%s591 + $0x42] sm:$0xff]
        %v613 = vld [vmem:[%s591 + $0x52] sm:$0xff]
        %v614 = vld [vmem:[%s591 + $0x62] sm:$0xff]
        %v615 = vld [vmem:[%s591 + $0x72] sm:$0xff]
        %624 = vrot.lane.b32.xlu0 %v551, 8
        %v625 = vpop.permute.xlu0 %624
        %626 = vrot.lane.b32.xlu0 %v552, 8
        %v627 = vpop.permute.xlu0 %626
        %628 = vrot.lane.b32.xlu0 %v553, 8
        %v629 = vpop.permute.xlu0 %628
        %630 = vrot.lane.b32.xlu0 %v554, 8
        %v631 = vpop.permute.xlu0 %630
        %632 = vrot.lane.b32.xlu0 %v555, 8
        %v633 = vpop.permute.xlu0 %632
        %634 = vrot.lane.b32.xlu0 %v556, 8
        %v635 = vpop.permute.xlu0 %634
        %636 = vrot.lane.b32.xlu0 %v557, 8
        %v637 = vpop.permute.xlu0 %636
        %638 = vrot.lane.b32.xlu0 %v558, 8
        %v639 = vpop.permute.xlu0 %638
        %656 = vrot.lane.b32.xlu0 %v559, 16
        %v657 = vpop.permute.xlu0 %656
        %658 = vrot.lane.b32.xlu0 %v560, 16
        %v659 = vpop.permute.xlu0 %658
        %660 = vrot.lane.b32.xlu0 %v561, 16
        %v661 = vpop.permute.xlu0 %660
        %662 = vrot.lane.b32.xlu0 %v562, 16
        %v663 = vpop.permute.xlu0 %662
        %664 = vrot.lane.b32.xlu0 %v563, 16
        %v665 = vpop.permute.xlu0 %664
        %666 = vrot.lane.b32.xlu0 %v564, 16
        %v667 = vpop.permute.xlu0 %666
        %668 = vrot.lane.b32.xlu0 %v565, 16
        %v669 = vpop.permute.xlu0 %668
        %670 = vrot.lane.b32.xlu0 %v566, 16
        %v671 = vpop.permute.xlu0 %670
        %688 = vrot.lane.b32.xlu0 %v567, 24
        %v689 = vpop.permute.xlu0 %688
        %690 = vrot.lane.b32.xlu0 %v568, 24
        %v691 = vpop.permute.xlu0 %690
        %692 = vrot.lane.b32.xlu0 %v569, 24
        %v693 = vpop.permute.xlu0 %692
        %694 = vrot.lane.b32.xlu0 %v570, 24
        %v695 = vpop.permute.xlu0 %694
        %696 = vrot.lane.b32.xlu0 %v571, 24
        %v697 = vpop.permute.xlu0 %696
        %698 = vrot.lane.b32.xlu0 %v572, 24
        %v699 = vpop.permute.xlu0 %698
        %700 = vrot.lane.b32.xlu0 %v573, 24
        %v701 = vpop.permute.xlu0 %700
        %702 = vrot.lane.b32.xlu0 %v574, 24
        %v703 = vpop.permute.xlu0 %702
        %720 = vrot.lane.b32.xlu0 %v575, 32
        %v721 = vpop.permute.xlu0 %720
        %722 = vrot.lane.b32.xlu0 %v576, 32
        %v723 = vpop.permute.xlu0 %722
        %724 = vrot.lane.b32.xlu0 %v577, 32
        %v725 = vpop.permute.xlu0 %724
        %726 = vrot.lane.b32.xlu0 %v578, 32
        %v727 = vpop.permute.xlu0 %726
        %728 = vrot.lane.b32.xlu0 %v579, 32
        %v729 = vpop.permute.xlu0 %728
        %730 = vrot.lane.b32.xlu0 %v580, 32
        %v731 = vpop.permute.xlu0 %730
        %732 = vrot.lane.b32.xlu0 %v581, 32
        %v733 = vpop.permute.xlu0 %732
        %734 = vrot.lane.b32.xlu0 %v582, 32
        %v735 = vpop.permute.xlu0 %734
        %752 = vrot.lane.b32.xlu0 %v583, 40
        %v753 = vpop.permute.xlu0 %752
        %754 = vrot.lane.b32.xlu0 %v584, 40
        %v755 = vpop.permute.xlu0 %754
        %756 = vrot.lane.b32.xlu0 %v585, 40
        %v757 = vpop.permute.xlu0 %756
        %758 = vrot.lane.b32.xlu0 %v586, 40
        %v759 = vpop.permute.xlu0 %758
        %760 = vrot.lane.b32.xlu0 %v587, 40
        %v761 = vpop.permute.xlu0 %760
        %762 = vrot.lane.b32.xlu0 %v588, 40
        %v763 = vpop.permute.xlu0 %762
        %764 = vrot.lane.b32.xlu0 %v589, 40
        %v765 = vpop.permute.xlu0 %764
        %766 = vrot.lane.b32.xlu0 %v590, 40
        %v767 = vpop.permute.xlu0 %766
        %784 = vrot.lane.b32.xlu0 %v592, 48
        %v785 = vpop.permute.xlu0 %784
        %786 = vrot.lane.b32.xlu0 %v593, 48
        %v787 = vpop.permute.xlu0 %786
        %788 = vrot.lane.b32.xlu0 %v594, 48
        %v789 = vpop.permute.xlu0 %788
        %790 = vrot.lane.b32.xlu0 %v595, 48
        %v791 = vpop.permute.xlu0 %790
        %792 = vrot.lane.b32.xlu0 %v596, 48
        %v793 = vpop.permute.xlu0 %792
        %794 = vrot.lane.b32.xlu0 %v597, 48
        %v795 = vpop.permute.xlu0 %794
        %796 = vrot.lane.b32.xlu0 %v598, 48
        %v797 = vpop.permute.xlu0 %796
        %798 = vrot.lane.b32.xlu0 %v599, 48
        %v799 = vpop.permute.xlu0 %798
        %816 = vrot.lane.b32.xlu0 %v600, 56
        %v817 = vpop.permute.xlu0 %816
        %818 = vrot.lane.b32.xlu0 %v601, 56
        %v819 = vpop.permute.xlu0 %818
        %820 = vrot.lane.b32.xlu0 %v602, 56
        %v821 = vpop.permute.xlu0 %820
        %822 = vrot.lane.b32.xlu0 %v603, 56
        %v823 = vpop.permute.xlu0 %822
        %824 = vrot.lane.b32.xlu0 %v604, 56
        %v825 = vpop.permute.xlu0 %824
        %826 = vrot.lane.b32.xlu0 %v605, 56
        %v827 = vpop.permute.xlu0 %826
        %828 = vrot.lane.b32.xlu0 %v606, 56
        %v829 = vpop.permute.xlu0 %828
        %830 = vrot.lane.b32.xlu0 %v607, 56
        %v831 = vpop.permute.xlu0 %830
        %848 = vrot.lane.b32.xlu0 %v608, 64
        %v849 = vpop.permute.xlu0 %848
        %850 = vrot.lane.b32.xlu0 %v609, 64
        %v851 = vpop.permute.xlu0 %850
        %852 = vrot.lane.b32.xlu0 %v610, 64
        %v853 = vpop.permute.xlu0 %852
        %854 = vrot.lane.b32.xlu0 %v611, 64
        %v855 = vpop.permute.xlu0 %854
        %856 = vrot.lane.b32.xlu0 %v612, 64
        %v857 = vpop.permute.xlu0 %856
        %858 = vrot.lane.b32.xlu0 %v613, 64
        %v859 = vpop.permute.xlu0 %858
        %860 = vrot.lane.b32.xlu0 %v614, 64
        %v861 = vpop.permute.xlu0 %860
        %862 = vrot.lane.b32.xlu0 %v615, 64
        %v863 = vpop.permute.xlu0 %862
        %v872 = vsel %vm348, %v543, %v625
        %v873 = vsel %vm348, %v544, %v627
        %v874 = vsel %vm348, %v545, %v629
        %v875 = vsel %vm348, %v546, %v631
        %v876 = vsel %vm348, %v547, %v633
        %v877 = vsel %vm348, %v548, %v635
        %v878 = vsel %vm348, %v549, %v637
        %v879 = vsel %vm348, %v550, %v639
        %vm880 = vcmask 130048
        %v881 = vsel %vm880, %v872, %v657
        %v882 = vsel %vm880, %v873, %v659
        %v883 = vsel %vm880, %v874, %v661
        %v884 = vsel %vm880, %v875, %v663
        %v885 = vsel %vm880, %v876, %v665
        %v886 = vsel %vm880, %v877, %v667
        %v887 = vsel %vm880, %v878, %v669
        %v888 = vsel %vm880, %v879, %v671
        %vm889 = vcmask 195584
        %v890 = vsel %vm889, %v881, %v689
        %v891 = vsel %vm889, %v882, %v691
        %v892 = vsel %vm889, %v883, %v693
        %v893 = vsel %vm889, %v884, %v695
        %v894 = vsel %vm889, %v885, %v697
        %v895 = vsel %vm889, %v886, %v699
        %v896 = vsel %vm889, %v887, %v701
        %v897 = vsel %vm889, %v888, %v703
        %vm898 = vcmask 261120
        %v899 = vsel %vm898, %v890, %v721
        %v900 = vsel %vm898, %v891, %v723
        %v901 = vsel %vm898, %v892, %v725
        %v902 = vsel %vm898, %v893, %v727
        %v903 = vsel %vm898, %v894, %v729
        %v904 = vsel %vm898, %v895, %v731
        %v905 = vsel %vm898, %v896, %v733
        %v906 = vsel %vm898, %v897, %v735
        %vm907 = vcmask 326656
        %v908 = vsel %vm907, %v899, %v753
        %v909 = vsel %vm907, %v900, %v755
        %v910 = vsel %vm907, %v901, %v757
        %v911 = vsel %vm907, %v902, %v759
        %v912 = vsel %vm907, %v903, %v761
        %v913 = vsel %vm907, %v904, %v763
        %v914 = vsel %vm907, %v905, %v765
        %v915 = vsel %vm907, %v906, %v767
        %vm916 = vcmask 392192
        %v917 = vsel %vm916, %v908, %v785
        %v918 = vsel %vm916, %v909, %v787
        %v919 = vsel %vm916, %v910, %v789
        %v920 = vsel %vm916, %v911, %v791
        %v921 = vsel %vm916, %v912, %v793
        %v922 = vsel %vm916, %v913, %v795
        %v923 = vsel %vm916, %v914, %v797
        %v924 = vsel %vm916, %v915, %v799
        %vm925 = vcmask 457728
        %v926 = vsel %vm925, %v917, %v817
        %v927 = vsel %vm925, %v918, %v819
        %v928 = vsel %vm925, %v919, %v821
        %v929 = vsel %vm925, %v920, %v823
        %v930 = vsel %vm925, %v921, %v825
        %v931 = vsel %vm925, %v922, %v827
        %v932 = vsel %vm925, %v923, %v829
        %v933 = vsel %vm925, %v924, %v831
        %vm934 = vcmask 523264
        %v935 = vsel %vm934, %v926, %v849
        %v936 = vsel %vm934, %v927, %v851
        %v937 = vsel %vm934, %v928, %v853
        %v938 = vsel %vm934, %v929, %v855
        %v939 = vsel %vm934, %v930, %v857
        %v940 = vsel %vm934, %v931, %v859
        %v941 = vsel %vm934, %v932, %v861
        %v942 = vsel %vm934, %v933, %v863
        %v943 = vpack.c.bf16 %v936, %v935
        %v944 = vpack.c.bf16 %v938, %v937
        %v945 = vpack.c.bf16 %v940, %v939
        %v946 = vpack.c.bf16 %v942, %v941
        %v947 = vld [vmem:[%s3] sm:$0xf]
        %v948 = vld [vmem:[%s3 + $0x4] sm:$0xf]
        %v949 = vld [vmem:[%s3 + $0x8] sm:$0xf]
        %v950 = vld [vmem:[%s3 + $0xc] sm:$0xf]
        %v951 = vld [vmem:[%s3 + $0x10] sm:$0xf]
        %v952 = vld [vmem:[%s3 + $0x14] sm:$0xf]
        %v953 = vld [vmem:[%s3 + $0x18] sm:$0xf]
        %v954 = vld [vmem:[%s3 + $0x1c] sm:$0xf]
        %v955 = vld [vmem:[%s3 + $0x20] sm:$0xf]
        %v965 = vunpack.c.l.b16 %v947
        %v966 = vunpack.c.l.b16 %v948
        %v967 = vunpack.c.l.b16 %v949
        %v968 = vunpack.c.l.b16 %v950
        %v969 = vunpack.c.l.b16 %v951
        %v970 = vunpack.c.l.b16 %v952
        %v971 = vunpack.c.l.b16 %v953
        %v972 = vunpack.c.l.b16 %v954
        %v973 = vunpack.c.l.b16 %v955
        %v974 = vpack.c.b16 %v966, %v965
        %v975 = vpack.c.b16 %v968, %v967
        %v976 = vpack.c.b16 %v970, %v969
        %v977 = vpack.c.b16 %v972, %v971
        %v978 = vpack.c.b16 %v973, %v973
        %vm983 = vcmask 588800
        %v985 = vsel %vm983, %v943, 0
        %v988 = vsel %vm983, %v944, 0
        %v991 = vsel %vm983, %v945, 0
        %v994 = vsel %vm983, %v946, 0
        %vm996 = vcmask 1043456
        %v998 = vsel %vm996, %v978, 0
        %1000 = vmatprep.subr.bf16.mxu0 0
        %1001 = vmatpush1.bf16.msra.mxu0 %v974
        %1002 = vmatprep.subr.bf16.mxu0 0
        %1003 = vmatpush1.bf16.msra.mxu0 %v975
        %1004 = vmatprep.subr.bf16.mxu0 0
        %1005 = vmatpush1.bf16.msra.mxu0 %v976
        %1006 = vmatprep.subr.bf16.mxu0 0
        %1007 = vmatpush1.bf16.msra.mxu0 %v977
        %1008 = vmatprep.subr.bf16.mxu0 0
        %1009 = vmatpush1.bf16.msra.mxu0 %v998
        %1010 = vmatprep.subr.bf16.mxu0 0
        %1011 = vmatpush1.bf16.msra.mxu0 0
        %1012 = vmatprep.subr.bf16.mxu0 0
        %1013 = vmatpush1.bf16.msra.mxu0 0
        %1014 = vmatprep.subr.bf16.mxu0 0
        %1015 = vmatpush1.bf16.msra.mxu0 0
        %1016 = vmatprep.subr.bf16.mxu0 0
        %1017 = vmatpush1.bf16.msra.mxu0 0
        %1018 = vmatprep.subr.bf16.mxu0 0
        %1019 = vmatpush1.bf16.msra.mxu0 0
        %1020 = vmatprep.subr.bf16.mxu0 0
        %1021 = vmatpush1.bf16.msra.mxu0 0
        %1022 = vmatprep.subr.bf16.mxu0 0
        %1023 = vmatpush1.bf16.msra.mxu0 0
        %1024 = vmatprep.subr.bf16.mxu0 0
        %1025 = vmatpush1.bf16.msra.mxu0 0
        %1026 = vmatprep.subr.bf16.mxu0 0
        %1027 = vmatpush1.bf16.msra.mxu0 0
        %1028 = vmatprep.subr.bf16.mxu0 0
        %1029 = vmatpush1.bf16.msra.mxu0 0
        %1030 = vmatprep.subr.bf16.mxu0 0
        %1031 = vmatpush1.bf16.msra.mxu0 0
        %1032 = vmatprep.mubr.bf16.mxu0 0
        %1033 = vmatmul.mubr.bf16.gmra.mrb[0].mxu0 %v985
        %v1034 = vpop.f32.mrb[0].mxu0
        %v1035 = vadd.f32 0.0, %v1034
        %v1036 = vpop.f32.mrb[0].mxu0
        %v1037 = vpop.f32.mrb[0].mxu0
        %v1038 = vadd.f32 0.0, %v1037
        %v1039 = vpop.f32.mrb[0].mxu0
        %1040 = vmatprep.mubr.bf16.mxu0 0
        %1041 = vmatmul.mubr.bf16.gmra.mrb[0].mxu0 %v988
        %v1042 = vpop.f32.mrb[0].mxu0
        %v1043 = vadd.f32 0.0, %v1042
        %v1044 = vpop.f32.mrb[0].mxu0
        %v1045 = vpop.f32.mrb[0].mxu0
        %v1046 = vadd.f32 0.0, %v1045
        %v1047 = vpop.f32.mrb[0].mxu0
        %1048 = vmatprep.mubr.bf16.mxu0 0
        %1049 = vmatmul.mubr.bf16.gmra.mrb[0].mxu0 %v991
        %v1050 = vpop.f32.mrb[0].mxu0
        %v1051 = vadd.f32 0.0, %v1050
        %v1052 = vpop.f32.mrb[0].mxu0
        %v1053 = vpop.f32.mrb[0].mxu0
        %v1054 = vadd.f32 0.0, %v1053
        %v1055 = vpop.f32.mrb[0].mxu0
        %1056 = vmatprep.mubr.bf16.mxu0 0
        %1057 = vmatmul.mubr.bf16.gmra.mrb[0].mxu0 %v994
        %v1058 = vpop.f32.mrb[0].mxu0
        %v1059 = vadd.f32 0.0, %v1058
        %v1060 = vpop.f32.mrb[0].mxu0
        %v1061 = vpop.f32.mrb[0].mxu0
        %v1062 = vadd.f32 0.0, %v1061
        %v1063 = vpop.f32.mrb[0].mxu0
        %1064 = vdwg.mxu0
        %v1065 = vld [vmem:[%s4] sm:$0x1]
        %v1067 = vlaneseq
        %v1068 = vshrl.u32 %v1067, 7
        %v1069 = vsub.s32 0, %v1068
        %v1070 = vrot.slane %v1065, %v1069
        %v1072 = vmul.f32 %v1035, %v1070
        %v1073 = vmul.f32 %v1038, %v1070
        %v1074 = vmul.f32 %v1043, %v1070
        %v1075 = vmul.f32 %v1046, %v1070
        %v1076 = vmul.f32 %v1051, %v1070
        %v1077 = vmul.f32 %v1054, %v1070
        %v1078 = vmul.f32 %v1059, %v1070
        %v1079 = vmul.f32 %v1062, %v1070
        %v1080 = vld [vmem:[%s5] sm:$0x1]
        %v1082 = vlaneseq
        %v1083 = vshrl.u32 %v1082, 7
        %v1084 = vsub.s32 0, %v1083
        %v1085 = vrot.slane %v1080, %v1084
        %v1087 = vadd.f32 %v1072, %v1085
        %v1088 = vadd.f32 %v1073, %v1085
        %v1089 = vadd.f32 %v1074, %v1085
        %v1090 = vadd.f32 %v1075, %v1085
        %v1091 = vadd.f32 %v1076, %v1085
        %v1092 = vadd.f32 %v1077, %v1085
        %v1093 = vadd.f32 %v1078, %v1085
        %v1094 = vadd.f32 %v1079, %v1085
        %v1095 = vmax.f32 %v1087, 0.0
        %v1096 = vmax.f32 %v1088, 0.0
        %v1097 = vmax.f32 %v1089, 0.0
        %v1098 = vmax.f32 %v1090, 0.0
        %v1099 = vmax.f32 %v1091, 0.0
        %v1100 = vmax.f32 %v1092, 0.0
        %v1101 = vmax.f32 %v1093, 0.0
        %v1102 = vmax.f32 %v1094, 0.0
        %1103 = vst.msk [vmem:[%s534 + $0x1] sm:$0xff] %vm348, %v1095
        %1104 = vst.msk [vmem:[%s534 + $0x11] sm:$0xff] %vm348, %v1096
        %1105 = vst.msk [vmem:[%s534 + $0x21] sm:$0xff] %vm348, %v1097
        %1106 = vst.msk [vmem:[%s534 + $0x31] sm:$0xff] %vm348, %v1098
        %1107 = vst.msk [vmem:[%s534 + $0x41] sm:$0xff] %vm348, %v1099
        %1108 = vst.msk [vmem:[%s534 + $0x51] sm:$0xff] %vm348, %v1100
        %1109 = vst.msk [vmem:[%s534 + $0x61] sm:$0xff] %vm348, %v1101
        %1110 = vst.msk [vmem:[%s534 + $0x71] sm:$0xff] %vm348, %v1102
        %v1111 = vld [vmem:[#allocation2] sm:$0xff]
        %v1112 = vld [vmem:[#allocation2 + $0x10] sm:$0xff]
        %v1113 = vld [vmem:[#allocation2 + $0x20] sm:$0xff]
        %v1114 = vld [vmem:[#allocation2 + $0x30] sm:$0xff]
        %v1115 = vld [vmem:[#allocation2 + $0x40] sm:$0xff]
        %v1116 = vld [vmem:[#allocation2 + $0x50] sm:$0xff]
        %v1117 = vld [vmem:[#allocation2 + $0x60] sm:$0xff]
        %v1118 = vld [vmem:[#allocation2 + $0x70] sm:$0xff]
        %v1119 = vld [vmem:[#allocation2 + $0x1] sm:$0xff]
        %v1120 = vld [vmem:[#allocation2 + $0x11] sm:$0xff]
        %v1121 = vld [vmem:[#allocation2 + $0x21] sm:$0xff]
        %v1122 = vld [vmem:[#allocation2 + $0x31] sm:$0xff]
        %v1123 = vld [vmem:[#allocation2 + $0x41] sm:$0xff]
        %v1124 = vld [vmem:[#allocation2 + $0x51] sm:$0xff]
        %v1125 = vld [vmem:[#allocation2 + $0x61] sm:$0xff]
        %v1126 = vld [vmem:[#allocation2 + $0x71] sm:$0xff]
        %v1127 = vld [vmem:[#allocation2 + $0x2] sm:$0xff]
        %v1128 = vld [vmem:[#allocation2 + $0x12] sm:$0xff]
        %v1129 = vld [vmem:[#allocation2 + $0x22] sm:$0xff]
        %v1130 = vld [vmem:[#allocation2 + $0x32] sm:$0xff]
        %v1131 = vld [vmem:[#allocation2 + $0x42] sm:$0xff]
        %v1132 = vld [vmem:[#allocation2 + $0x52] sm:$0xff]
        %v1133 = vld [vmem:[#allocation2 + $0x62] sm:$0xff]
        %v1134 = vld [vmem:[#allocation2 + $0x72] sm:$0xff]
        %v1135 = vld [vmem:[%s534] sm:$0xff]
        %v1136 = vld [vmem:[%s534 + $0x10] sm:$0xff]
        %v1137 = vld [vmem:[%s534 + $0x20] sm:$0xff]
        %v1138 = vld [vmem:[%s534 + $0x30] sm:$0xff]
        %v1139 = vld [vmem:[%s534 + $0x40] sm:$0xff]
        %v1140 = vld [vmem:[%s534 + $0x50] sm:$0xff]
        %v1141 = vld [vmem:[%s534 + $0x60] sm:$0xff]
        %v1142 = vld [vmem:[%s534 + $0x70] sm:$0xff]
        %v1143 = vld [vmem:[%s534 + $0x1] sm:$0xff]
        %v1144 = vld [vmem:[%s534 + $0x11] sm:$0xff]
        %v1145 = vld [vmem:[%s534 + $0x21] sm:$0xff]
        %v1146 = vld [vmem:[%s534 + $0x31] sm:$0xff]
        %v1147 = vld [vmem:[%s534 + $0x41] sm:$0xff]
        %v1148 = vld [vmem:[%s534 + $0x51] sm:$0xff]
        %v1149 = vld [vmem:[%s534 + $0x61] sm:$0xff]
        %v1150 = vld [vmem:[%s534 + $0x71] sm:$0xff]
        %v1151 = vld [vmem:[%s534 + $0x2] sm:$0xff]
        %v1152 = vld [vmem:[%s534 + $0x12] sm:$0xff]
        %v1153 = vld [vmem:[%s534 + $0x22] sm:$0xff]
        %v1154 = vld [vmem:[%s534 + $0x32] sm:$0xff]
        %v1155 = vld [vmem:[%s534 + $0x42] sm:$0xff]
        %v1156 = vld [vmem:[%s534 + $0x52] sm:$0xff]
        %v1157 = vld [vmem:[%s534 + $0x62] sm:$0xff]
        %v1158 = vld [vmem:[%s534 + $0x72] sm:$0xff]
        %v1159 = vld [vmem:[%s591] sm:$0xff]
        %v1160 = vld [vmem:[%s591 + $0x10] sm:$0xff]
        %v1161 = vld [vmem:[%s591 + $0x20] sm:$0xff]
        %v1162 = vld [vmem:[%s591 + $0x30] sm:$0xff]
        %v1163 = vld [vmem:[%s591 + $0x40] sm:$0xff]
        %v1164 = vld [vmem:[%s591 + $0x50] sm:$0xff]
        %v1165 = vld [vmem:[%s591 + $0x60] sm:$0xff]
        %v1166 = vld [vmem:[%s591 + $0x70] sm:$0xff]
        %v1167 = vld [vmem:[%s591 + $0x1] sm:$0xff]
        %v1168 = vld [vmem:[%s591 + $0x11] sm:$0xff]
        %v1169 = vld [vmem:[%s591 + $0x21] sm:$0xff]
        %v1170 = vld [vmem:[%s591 + $0x31] sm:$0xff]
        %v1171 = vld [vmem:[%s591 + $0x41] sm:$0xff]
        %v1172 = vld [vmem:[%s591 + $0x51] sm:$0xff]
        %v1173 = vld [vmem:[%s591 + $0x61] sm:$0xff]
        %v1174 = vld [vmem:[%s591 + $0x71] sm:$0xff]
        %v1175 = vld [vmem:[%s591 + $0x2] sm:$0xff]
        %v1176 = vld [vmem:[%s591 + $0x12] sm:$0xff]
        %v1177 = vld [vmem:[%s591 + $0x22] sm:$0xff]
        %v1178 = vld [vmem:[%s591 + $0x32] sm:$0xff]
        %v1179 = vld [vmem:[%s591 + $0x42] sm:$0xff]
        %v1180 = vld [vmem:[%s591 + $0x52] sm:$0xff]
        %v1181 = vld [vmem:[%s591 + $0x62] sm:$0xff]
        %v1182 = vld [vmem:[%s591 + $0x72] sm:$0xff]
        %1191 = vrot.lane.b32.xlu0 %v1119, 8
        %v1192 = vpop.permute.xlu0 %1191
        %1193 = vrot.lane.b32.xlu0 %v1120, 8
        %v1194 = vpop.permute.xlu0 %1193
        %1195 = vrot.lane.b32.xlu0 %v1121, 8
        %v1196 = vpop.permute.xlu0 %1195
        %1197 = vrot.lane.b32.xlu0 %v1122, 8
        %v1198 = vpop.permute.xlu0 %1197
        %1199 = vrot.lane.b32.xlu0 %v1123, 8
        %v1200 = vpop.permute.xlu0 %1199
        %1201 = vrot.lane.b32.xlu0 %v1124, 8
        %v1202 = vpop.permute.xlu0 %1201
        %1203 = vrot.lane.b32.xlu0 %v1125, 8
        %v1204 = vpop.permute.xlu0 %1203
        %1205 = vrot.lane.b32.xlu0 %v1126, 8
        %v1206 = vpop.permute.xlu0 %1205
        %1223 = vrot.lane.b32.xlu0 %v1127, 16
        %v1224 = vpop.permute.xlu0 %1223
        %1225 = vrot.lane.b32.xlu0 %v1128, 16
        %v1226 = vpop.permute.xlu0 %1225
        %1227 = vrot.lane.b32.xlu0 %v1129, 16
        %v1228 = vpop.permute.xlu0 %1227
        %1229 = vrot.lane.b32.xlu0 %v1130, 16
        %v1230 = vpop.permute.xlu0 %1229
        %1231 = vrot.lane.b32.xlu0 %v1131, 16
        %v1232 = vpop.permute.xlu0 %1231
        %1233 = vrot.lane.b32.xlu0 %v1132, 16
        %v1234 = vpop.permute.xlu0 %1233
        %1235 = vrot.lane.b32.xlu0 %v1133, 16
        %v1236 = vpop.permute.xlu0 %1235
        %1237 = vrot.lane.b32.xlu0 %v1134, 16
        %v1238 = vpop.permute.xlu0 %1237
        %1255 = vrot.lane.b32.xlu0 %v1135, 24
        %v1256 = vpop.permute.xlu0 %1255
        %1257 = vrot.lane.b32.xlu0 %v1136, 24
        %v1258 = vpop.permute.xlu0 %1257
        %1259 = vrot.lane.b32.xlu0 %v1137, 24
        %v1260 = vpop.permute.xlu0 %1259
        %1261 = vrot.lane.b32.xlu0 %v1138, 24
        %v1262 = vpop.permute.xlu0 %1261
        %1263 = vrot.lane.b32.xlu0 %v1139, 24
        %v1264 = vpop.permute.xlu0 %1263
        %1265 = vrot.lane.b32.xlu0 %v1140, 24
        %v1266 = vpop.permute.xlu0 %1265
        %1267 = vrot.lane.b32.xlu0 %v1141, 24
        %v1268 = vpop.permute.xlu0 %1267
        %1269 = vrot.lane.b32.xlu0 %v1142, 24
        %v1270 = vpop.permute.xlu0 %1269
        %1287 = vrot.lane.b32.xlu0 %v1143, 32
        %v1288 = vpop.permute.xlu0 %1287
        %1289 = vrot.lane.b32.xlu0 %v1144, 32
        %v1290 = vpop.permute.xlu0 %1289
        %1291 = vrot.lane.b32.xlu0 %v1145, 32
        %v1292 = vpop.permute.xlu0 %1291
        %1293 = vrot.lane.b32.xlu0 %v1146, 32
        %v1294 = vpop.permute.xlu0 %1293
        %1295 = vrot.lane.b32.xlu0 %v1147, 32
        %v1296 = vpop.permute.xlu0 %1295
        %1297 = vrot.lane.b32.xlu0 %v1148, 32
        %v1298 = vpop.permute.xlu0 %1297
        %1299 = vrot.lane.b32.xlu0 %v1149, 32
        %v1300 = vpop.permute.xlu0 %1299
        %1301 = vrot.lane.b32.xlu0 %v1150, 32
        %v1302 = vpop.permute.xlu0 %1301
        %1319 = vrot.lane.b32.xlu0 %v1151, 40
        %v1320 = vpop.permute.xlu0 %1319
        %1321 = vrot.lane.b32.xlu0 %v1152, 40
        %v1322 = vpop.permute.xlu0 %1321
        %1323 = vrot.lane.b32.xlu0 %v1153, 40
        %v1324 = vpop.permute.xlu0 %1323
        %1325 = vrot.lane.b32.xlu0 %v1154, 40
        %v1326 = vpop.permute.xlu0 %1325
        %1327 = vrot.lane.b32.xlu0 %v1155, 40
        %v1328 = vpop.permute.xlu0 %1327
        %1329 = vrot.lane.b32.xlu0 %v1156, 40
        %v1330 = vpop.permute.xlu0 %1329
        %1331 = vrot.lane.b32.xlu0 %v1157, 40
        %v1332 = vpop.permute.xlu0 %1331
        %1333 = vrot.lane.b32.xlu0 %v1158, 40
        %v1334 = vpop.permute.xlu0 %1333
        %1351 = vrot.lane.b32.xlu0 %v1159, 48
        %v1352 = vpop.permute.xlu0 %1351
        %1353 = vrot.lane.b32.xlu0 %v1160, 48
        %v1354 = vpop.permute.xlu0 %1353
        %1355 = vrot.lane.b32.xlu0 %v1161, 48
        %v1356 = vpop.permute.xlu0 %1355
        %1357 = vrot.lane.b32.xlu0 %v1162, 48
        %v1358 = vpop.permute.xlu0 %1357
        %1359 = vrot.lane.b32.xlu0 %v1163, 48
        %v1360 = vpop.permute.xlu0 %1359
        %1361 = vrot.lane.b32.xlu0 %v1164, 48
        %v1362 = vpop.permute.xlu0 %1361
        %1363 = vrot.lane.b32.xlu0 %v1165, 48
        %v1364 = vpop.permute.xlu0 %1363
        %1365 = vrot.lane.b32.xlu0 %v1166, 48
        %v1366 = vpop.permute.xlu0 %1365
        %1383 = vrot.lane.b32.xlu0 %v1167, 56
        %v1384 = vpop.permute.xlu0 %1383
        %1385 = vrot.lane.b32.xlu0 %v1168, 56
        %v1386 = vpop.permute.xlu0 %1385
        %1387 = vrot.lane.b32.xlu0 %v1169, 56
        %v1388 = vpop.permute.xlu0 %1387
        %1389 = vrot.lane.b32.xlu0 %v1170, 56
        %v1390 = vpop.permute.xlu0 %1389
        %1391 = vrot.lane.b32.xlu0 %v1171, 56
        %v1392 = vpop.permute.xlu0 %1391
        %1393 = vrot.lane.b32.xlu0 %v1172, 56
        %v1394 = vpop.permute.xlu0 %1393
        %1395 = vrot.lane.b32.xlu0 %v1173, 56
        %v1396 = vpop.permute.xlu0 %1395
        %1397 = vrot.lane.b32.xlu0 %v1174, 56
        %v1398 = vpop.permute.xlu0 %1397
        %1415 = vrot.lane.b32.xlu0 %v1175, 64
        %v1416 = vpop.permute.xlu0 %1415
        %1417 = vrot.lane.b32.xlu0 %v1176, 64
        %v1418 = vpop.permute.xlu0 %1417
        %1419 = vrot.lane.b32.xlu0 %v1177, 64
        %v1420 = vpop.permute.xlu0 %1419
        %1421 = vrot.lane.b32.xlu0 %v1178, 64
        %v1422 = vpop.permute.xlu0 %1421
        %1423 = vrot.lane.b32.xlu0 %v1179, 64
        %v1424 = vpop.permute.xlu0 %1423
        %1425 = vrot.lane.b32.xlu0 %v1180, 64
        %v1426 = vpop.permute.xlu0 %1425
        %1427 = vrot.lane.b32.xlu0 %v1181, 64
        %v1428 = vpop.permute.xlu0 %1427
        %1429 = vrot.lane.b32.xlu0 %v1182, 64
        %v1430 = vpop.permute.xlu0 %1429
        %v1439 = vsel %vm348, %v1111, %v1192
        %v1440 = vsel %vm348, %v1112, %v1194
        %v1441 = vsel %vm348, %v1113, %v1196
        %v1442 = vsel %vm348, %v1114, %v1198
        %v1443 = vsel %vm348, %v1115, %v1200
        %v1444 = vsel %vm348, %v1116, %v1202
        %v1445 = vsel %vm348, %v1117, %v1204
        %v1446 = vsel %vm348, %v1118, %v1206
        %v1447 = vsel %vm880, %v1439, %v1224
        %v1448 = vsel %vm880, %v1440, %v1226
        %v1449 = vsel %vm880, %v1441, %v1228
        %v1450 = vsel %vm880, %v1442, %v1230
        %v1451 = vsel %vm880, %v1443, %v1232
        %v1452 = vsel %vm880, %v1444, %v1234
        %v1453 = vsel %vm880, %v1445, %v1236
        %v1454 = vsel %vm880, %v1446, %v1238
        %v1455 = vsel %vm889, %v1447, %v1256
        %v1456 = vsel %vm889, %v1448, %v1258
        %v1457 = vsel %vm889, %v1449, %v1260
        %v1458 = vsel %vm889, %v1450, %v1262
        %v1459 = vsel %vm889, %v1451, %v1264
        %v1460 = vsel %vm889, %v1452, %v1266
        %v1461 = vsel %vm889, %v1453, %v1268
        %v1462 = vsel %vm889, %v1454, %v1270
        %v1463 = vsel %vm898, %v1455, %v1288
        %v1464 = vsel %vm898, %v1456, %v1290
        %v1465 = vsel %vm898, %v1457, %v1292
        %v1466 = vsel %vm898, %v1458, %v1294
        %v1467 = vsel %vm898, %v1459, %v1296
        %v1468 = vsel %vm898, %v1460, %v1298
        %v1469 = vsel %vm898, %v1461, %v1300
        %v1470 = vsel %vm898, %v1462, %v1302
        %v1471 = vsel %vm907, %v1463, %v1320
        %v1472 = vsel %vm907, %v1464, %v1322
        %v1473 = vsel %vm907, %v1465, %v1324
        %v1474 = vsel %vm907, %v1466, %v1326
        %v1475 = vsel %vm907, %v1467, %v1328
        %v1476 = vsel %vm907, %v1468, %v1330
        %v1477 = vsel %vm907, %v1469, %v1332
        %v1478 = vsel %vm907, %v1470, %v1334
        %v1479 = vsel %vm916, %v1471, %v1352
        %v1480 = vsel %vm916, %v1472, %v1354
        %v1481 = vsel %vm916, %v1473, %v1356
        %v1482 = vsel %vm916, %v1474, %v1358
        %v1483 = vsel %vm916, %v1475, %v1360
        %v1484 = vsel %vm916, %v1476, %v1362
        %v1485 = vsel %vm916, %v1477, %v1364
        %v1486 = vsel %vm916, %v1478, %v1366
        %v1487 = vsel %vm925, %v1479, %v1384
        %v1488 = vsel %vm925, %v1480, %v1386
        %v1489 = vsel %vm925, %v1481, %v1388
        %v1490 = vsel %vm925, %v1482, %v1390
        %v1491 = vsel %vm925, %v1483, %v1392
        %v1492 = vsel %vm925, %v1484, %v1394
        %v1493 = vsel %vm925, %v1485, %v1396
        %v1494 = vsel %vm925, %v1486, %v1398
        %v1495 = vsel %vm934, %v1487, %v1416
        %v1496 = vsel %vm934, %v1488, %v1418
        %v1497 = vsel %vm934, %v1489, %v1420
        %v1498 = vsel %vm934, %v1490, %v1422
        %v1499 = vsel %vm934, %v1491, %v1424
        %v1500 = vsel %vm934, %v1492, %v1426
        %v1501 = vsel %vm934, %v1493, %v1428
        %v1502 = vsel %vm934, %v1494, %v1430
        %v1503 = vpack.c.bf16 %v1496, %v1495
        %v1504 = vpack.c.bf16 %v1498, %v1497
        %v1505 = vpack.c.bf16 %v1500, %v1499
        %v1506 = vpack.c.bf16 %v1502, %v1501
        %v1507 = vld [vmem:[%s6] sm:$0xf]
        %v1508 = vld [vmem:[%s6 + $0x4] sm:$0xf]
        %v1509 = vld [vmem:[%s6 + $0x8] sm:$0xf]
        %v1510 = vld [vmem:[%s6 + $0xc] sm:$0xf]
        %v1511 = vld [vmem:[%s6 + $0x10] sm:$0xf]
        %v1512 = vld [vmem:[%s6 + $0x14] sm:$0xf]
        %v1513 = vld [vmem:[%s6 + $0x18] sm:$0xf]
        %v1514 = vld [vmem:[%s6 + $0x1c] sm:$0xf]
        %v1515 = vld [vmem:[%s6 + $0x20] sm:$0xf]
        %v1525 = vunpack.c.l.b16 %v1507
        %v1526 = vunpack.c.l.b16 %v1508
        %v1527 = vunpack.c.l.b16 %v1509
        %v1528 = vunpack.c.l.b16 %v1510
        %v1529 = vunpack.c.l.b16 %v1511
        %v1530 = vunpack.c.l.b16 %v1512
        %v1531 = vunpack.c.l.b16 %v1513
        %v1532 = vunpack.c.l.b16 %v1514
        %v1533 = vunpack.c.l.b16 %v1515
        %v1534 = vpack.c.b16 %v1526, %v1525
        %v1535 = vpack.c.b16 %v1528, %v1527
        %v1536 = vpack.c.b16 %v1530, %v1529
        %v1537 = vpack.c.b16 %v1532, %v1531
        %v1538 = vpack.c.b16 %v1533, %v1533
        %v1544 = vsel %vm983, %v1503, 0
        %v1547 = vsel %vm983, %v1504, 0
        %v1550 = vsel %vm983, %v1505, 0
        %v1553 = vsel %vm983, %v1506, 0
        %v1556 = vsel %vm996, %v1538, 0
        %1558 = vmatprep.subr.bf16.mxu0 0
        %1559 = vmatpush1.bf16.msra.mxu0 %v1534
        %1560 = vmatprep.subr.bf16.mxu0 0
        %1561 = vmatpush1.bf16.msra.mxu0 %v1535
        %1562 = vmatprep.subr.bf16.mxu0 0
        %1563 = vmatpush1.bf16.msra.mxu0 %v1536
        %1564 = vmatprep.subr.bf16.mxu0 0
        %1565 = vmatpush1.bf16.msra.mxu0 %v1537
        %1566 = vmatprep.subr.bf16.mxu0 0
        %1567 = vmatpush1.bf16.msra.mxu0 %v1556
        %1568 = vmatprep.subr.bf16.mxu0 0
        %1569 = vmatpush1.bf16.msra.mxu0 0
        %1570 = vmatprep.subr.bf16.mxu0 0
        %1571 = vmatpush1.bf16.msra.mxu0 0
        %1572 = vmatprep.subr.bf16.mxu0 0
        %1573 = vmatpush1.bf16.msra.mxu0 0
        %1574 = vmatprep.subr.bf16.mxu0 0
        %1575 = vmatpush1.bf16.msra.mxu0 0
        %1576 = vmatprep.subr.bf16.mxu0 0
        %1577 = vmatpush1.bf16.msra.mxu0 0
        %1578 = vmatprep.subr.bf16.mxu0 0
        %1579 = vmatpush1.bf16.msra.mxu0 0
        %1580 = vmatprep.subr.bf16.mxu0 0
        %1581 = vmatpush1.bf16.msra.mxu0 0
        %1582 = vmatprep.subr.bf16.mxu0 0
        %1583 = vmatpush1.bf16.msra.mxu0 0
        %1584 = vmatprep.subr.bf16.mxu0 0
        %1585 = vmatpush1.bf16.msra.mxu0 0
        %1586 = vmatprep.subr.bf16.mxu0 0
        %1587 = vmatpush1.bf16.msra.mxu0 0
        %1588 = vmatprep.subr.bf16.mxu0 0
        %1589 = vmatpush1.bf16.msra.mxu0 0
        %1590 = vmatprep.mubr.bf16.mxu0 0
        %1591 = vmatmul.mubr.bf16.gmra.mrb[0].mxu0 %v1544
        %v1592 = vpop.f32.mrb[0].mxu0
        %v1593 = vadd.f32 0.0, %v1592
        %v1594 = vpop.f32.mrb[0].mxu0
        %v1595 = vpop.f32.mrb[0].mxu0
        %v1596 = vadd.f32 0.0, %v1595
        %v1597 = vpop.f32.mrb[0].mxu0
        %1598 = vmatprep.mubr.bf16.mxu0 0
        %1599 = vmatmul.mubr.bf16.gmra.mrb[0].mxu0 %v1547
        %v1600 = vpop.f32.mrb[0].mxu0
        %v1601 = vadd.f32 0.0, %v1600
        %v1602 = vpop.f32.mrb[0].mxu0
        %v1603 = vpop.f32.mrb[0].mxu0
        %v1604 = vadd.f32 0.0, %v1603
        %v1605 = vpop.f32.mrb[0].mxu0
        %1606 = vmatprep.mubr.bf16.mxu0 0
        %1607 = vmatmul.mubr.bf16.gmra.mrb[0].mxu0 %v1550
        %v1608 = vpop.f32.mrb[0].mxu0
        %v1609 = vadd.f32 0.0, %v1608
        %v1610 = vpop.f32.mrb[0].mxu0
        %v1611 = vpop.f32.mrb[0].mxu0
        %v1612 = vadd.f32 0.0, %v1611
        %v1613 = vpop.f32.mrb[0].mxu0
        %1614 = vmatprep.mubr.bf16.mxu0 0
        %1615 = vmatmul.mubr.bf16.gmra.mrb[0].mxu0 %v1553
        %v1616 = vpop.f32.mrb[0].mxu0
        %v1617 = vadd.f32 0.0, %v1616
        %v1618 = vpop.f32.mrb[0].mxu0
        %v1619 = vpop.f32.mrb[0].mxu0
        %v1620 = vadd.f32 0.0, %v1619
        %v1621 = vpop.f32.mrb[0].mxu0
        %1622 = vdwg.mxu0
        %v1623 = vld [vmem:[%s7] sm:$0x1]
        %v1625 = vlaneseq
        %v1626 = vshrl.u32 %v1625, 7
        %v1627 = vsub.s32 0, %v1626
        %v1628 = vrot.slane %v1623, %v1627
        %v1630 = vmul.f32 %v1593, %v1628
        %v1631 = vmul.f32 %v1596, %v1628
        %v1632 = vmul.f32 %v1601, %v1628
        %v1633 = vmul.f32 %v1604, %v1628
        %v1634 = vmul.f32 %v1609, %v1628
        %v1635 = vmul.f32 %v1612, %v1628
        %v1636 = vmul.f32 %v1617, %v1628
        %v1637 = vmul.f32 %v1620, %v1628
        %v1638 = vld [vmem:[%s8] sm:$0x1]
        %v1640 = vlaneseq
        %v1641 = vshrl.u32 %v1640, 7
        %v1642 = vsub.s32 0, %v1641
        %v1643 = vrot.slane %v1638, %v1642
        %v1645 = vadd.f32 %v1630, %v1643
        %v1646 = vadd.f32 %v1631, %v1643
        %v1647 = vadd.f32 %v1632, %v1643
        %v1648 = vadd.f32 %v1633, %v1643
        %v1649 = vadd.f32 %v1634, %v1643
        %v1650 = vadd.f32 %v1635, %v1643
        %v1651 = vadd.f32 %v1636, %v1643
        %v1652 = vadd.f32 %v1637, %v1643
        %v1653 = vadd.f32 %v1645, %v477
        %v1654 = vadd.f32 %v1646, %v480
        %v1655 = vadd.f32 %v1647, %v485
        %v1656 = vadd.f32 %v1648, %v488
        %v1657 = vadd.f32 %v1649, %v493
        %v1658 = vadd.f32 %v1650, %v496
        %v1659 = vadd.f32 %v1651, %v501
        %v1660 = vadd.f32 %v1652, %v504
        %v1661 = vmax.f32 %v1653, 0.0
        %v1662 = vmax.f32 %v1654, 0.0
        %v1663 = vmax.f32 %v1655, 0.0
        %v1664 = vmax.f32 %v1656, 0.0
        %v1665 = vmax.f32 %v1657, 0.0
        %v1666 = vmax.f32 %v1658, 0.0
        %v1667 = vmax.f32 %v1659, 0.0
        %v1668 = vmax.f32 %v1660, 0.0
        %v1669 = vlaneseq
        %v1670 = vshrl.u32 %v1669, 7
        %v1671 = vlaneseq
        %v1672 = vand.u32 %v1671, 127
        %v1673 = vmul.u32 %v1670, 2
        %vm1674 = vcmp.eq.s32.totalorder %v1672, %v1673
        %v1675 = vsel %vm1674, 1, 0
        %v1676 = vcvt.s32.f32 %v1675
        %v1678 = vsel %vm348, %v1676, 0
        %v1681 = vsel %vm348, %v1661, 0
        %v1684 = vsel %vm348, %v1662, 0
        %v1687 = vsel %vm348, %v1663, 0
        %v1690 = vsel %vm348, %v1664, 0
        %v1693 = vsel %vm348, %v1665, 0
        %v1696 = vsel %vm348, %v1666, 0
        %v1699 = vsel %vm348, %v1667, 0
        %v1702 = vsel %vm348, %v1668, 0
        %1704 = vmatprep.subr.mxu0 0.0
        %1705 = vmatpush1.xpose.msra.mxu0 %v1681
        %1706 = vmatprep.subr.mxu0 0.0
        %1707 = vmatpush1.xpose.msra.mxu0 %v1684
        %1708 = vmatprep.subr.mxu0 0.0
        %1709 = vmatpush1.xpose.msra.mxu0 %v1687
        %1710 = vmatprep.subr.mxu0 0.0
        %1711 = vmatpush1.xpose.msra.mxu0 %v1690
        %1712 = vmatprep.subr.mxu0 0.0
        %1713 = vmatpush1.xpose.msra.mxu0 %v1693
        %1714 = vmatprep.subr.mxu0 0.0
        %1715 = vmatpush1.xpose.msra.mxu0 %v1696
        %1716 = vmatprep.subr.mxu0 0.0
        %1717 = vmatpush1.xpose.msra.mxu0 %v1699
        %1718 = vmatprep.subr.mxu0 0.0
        %1719 = vmatpush1.xpose.msra.mxu0 %v1702
        %1720 = vmatprep.subr.mxu0 0.0
        %1721 = vmatpush1.xpose.msra.mxu0 0.0
        %1722 = vmatprep.subr.mxu0 0.0
        %1723 = vmatpush1.xpose.msra.mxu0 0.0
        %1724 = vmatprep.subr.mxu0 0.0
        %1725 = vmatpush1.xpose.msra.mxu0 0.0
        %1726 = vmatprep.subr.mxu0 0.0
        %1727 = vmatpush1.xpose.msra.mxu0 0.0
        %1728 = vmatprep.subr.mxu0 0.0
        %1729 = vmatpush1.xpose.msra.mxu0 0.0
        %1730 = vmatprep.subr.mxu0 0.0
        %1731 = vmatpush1.xpose.msra.mxu0 0.0
        %1732 = vmatprep.subr.mxu0 0.0
        %1733 = vmatpush1.xpose.msra.mxu0 0.0
        %1734 = vmatprep.subr.mxu0 0.0
        %1735 = vmatpush1.xpose.msra.mxu0 0.0
        %1736 = vmatprep.subr.mxu0 0.0
        %1737 = vmatpush1.xpose.msra.mxu0 0.0
        %1738 = vmatprep.subr.mxu0 0.0
        %1739 = vmatpush1.xpose.msra.mxu0 0.0
        %1740 = vmatprep.subr.mxu0 0.0
        %1741 = vmatpush1.xpose.msra.mxu0 0.0
        %1742 = vmatprep.subr.mxu0 0.0
        %1743 = vmatpush1.xpose.msra.mxu0 0.0
        %1744 = vmatprep.subr.mxu0 0.0
        %1745 = vmatpush1.xpose.msra.mxu0 0.0
        %1746 = vmatprep.subr.mxu0 0.0
        %1747 = vmatpush1.xpose.msra.mxu0 0.0
        %1748 = vmatprep.subr.mxu0 0.0
        %1749 = vmatpush1.xpose.msra.mxu0 0.0
        %1750 = vmatprep.subr.mxu0 0.0
        %1751 = vmatpush1.xpose.msra.mxu0 0.0
        %1752 = vmatprep.subr.mxu0 0.0
        %1753 = vmatpush1.xpose.msra.mxu0 0.0
        %1754 = vmatprep.subr.mxu0 0.0
        %1755 = vmatpush1.xpose.msra.mxu0 0.0
        %1756 = vmatprep.subr.mxu0 0.0
        %1757 = vmatpush1.xpose.msra.mxu0 0.0
        %1758 = vmatprep.subr.mxu0 0.0
        %1759 = vmatpush1.xpose.msra.mxu0 0.0
        %1760 = vmatprep.subr.mxu0 0.0
        %1761 = vmatpush1.xpose.msra.mxu0 0.0
        %1762 = vmatprep.subr.mxu0 0.0
        %1763 = vmatpush1.xpose.msra.mxu0 0.0
        %1764 = vmatprep.subr.mxu0 0.0
        %1765 = vmatpush1.xpose.msra.mxu0 0.0
        %1766 = vmatprep.subr.mxu0 0.0
        %1767 = vmatpush1.xpose.msra.mxu0 0.0
        %1768 = vmatprep.mubr.f32.mxu0 0.0
        %1769 = vmatmul.mubr.f32.gmra.mrb[0].mxu0 %v1678
        %v1770 = vpop.f32.mrb[0].mxu0
        %v1771 = vadd.f32 0.0, %v1770
        %v1772 = vpop.f32.mrb[0].mxu0
        %1773 = vdwg.mxu0
        %v1774 = vadd.s32 %v1673, 1
        %vm1775 = vcmp.eq.s32.totalorder %v1672, %v1774
        %v1776 = vsel %vm1775, 1, 0
        %v1777 = vcvt.s32.f32 %v1776
        %v1779 = vsel %vm348, %v1777, 0
        %1781 = vmatprep.subr.mxu0 0.0
        %1782 = vmatpush1.xpose.msra.mxu0 %v1681
        %1783 = vmatprep.subr.mxu0 0.0
        %1784 = vmatpush1.xpose.msra.mxu0 %v1684
        %1785 = vmatprep.subr.mxu0 0.0
        %1786 = vmatpush1.xpose.msra.mxu0 %v1687
        %1787 = vmatprep.subr.mxu0 0.0
        %1788 = vmatpush1.xpose.msra.mxu0 %v1690
        %1789 = vmatprep.subr.mxu0 0.0
        %1790 = vmatpush1.xpose.msra.mxu0 %v1693
        %1791 = vmatprep.subr.mxu0 0.0
        %1792 = vmatpush1.xpose.msra.mxu0 %v1696
        %1793 = vmatprep.subr.mxu0 0.0
        %1794 = vmatpush1.xpose.msra.mxu0 %v1699
        %1795 = vmatprep.subr.mxu0 0.0
        %1796 = vmatpush1.xpose.msra.mxu0 %v1702
        %1797 = vmatprep.subr.mxu0 0.0
        %1798 = vmatpush1.xpose.msra.mxu0 0.0
        %1799 = vmatprep.subr.mxu0 0.0
        %1800 = vmatpush1.xpose.msra.mxu0 0.0
        %1801 = vmatprep.subr.mxu0 0.0
        %1802 = vmatpush1.xpose.msra.mxu0 0.0
        %1803 = vmatprep.subr.mxu0 0.0
        %1804 = vmatpush1.xpose.msra.mxu0 0.0
        %1805 = vmatprep.subr.mxu0 0.0
        %1806 = vmatpush1.xpose.msra.mxu0 0.0
        %1807 = vmatprep.subr.mxu0 0.0
        %1808 = vmatpush1.xpose.msra.mxu0 0.0
        %1809 = vmatprep.subr.mxu0 0.0
        %1810 = vmatpush1.xpose.msra.mxu0 0.0
        %1811 = vmatprep.subr.mxu0 0.0
        %1812 = vmatpush1.xpose.msra.mxu0 0.0
        %1813 = vmatprep.subr.mxu0 0.0
        %1814 = vmatpush1.xpose.msra.mxu0 0.0
        %1815 = vmatprep.subr.mxu0 0.0
        %1816 = vmatpush1.xpose.msra.mxu0 0.0
        %1817 = vmatprep.subr.mxu0 0.0
        %1818 = vmatpush1.xpose.msra.mxu0 0.0
        %1819 = vmatprep.subr.mxu0 0.0
        %1820 = vmatpush1.xpose.msra.mxu0 0.0
        %1821 = vmatprep.subr.mxu0 0.0
        %1822 = vmatpush1.xpose.msra.mxu0 0.0
        %1823 = vmatprep.subr.mxu0 0.0
        %1824 = vmatpush1.xpose.msra.mxu0 0.0
        %1825 = vmatprep.subr.mxu0 0.0
        %1826 = vmatpush1.xpose.msra.mxu0 0.0
        %1827 = vmatprep.subr.mxu0 0.0
        %1828 = vmatpush1.xpose.msra.mxu0 0.0
        %1829 = vmatprep.subr.mxu0 0.0
        %1830 = vmatpush1.xpose.msra.mxu0 0.0
        %1831 = vmatprep.subr.mxu0 0.0
        %1832 = vmatpush1.xpose.msra.mxu0 0.0
        %1833 = vmatprep.subr.mxu0 0.0
        %1834 = vmatpush1.xpose.msra.mxu0 0.0
        %1835 = vmatprep.subr.mxu0 0.0
        %1836 = vmatpush1.xpose.msra.mxu0 0.0
        %1837 = vmatprep.subr.mxu0 0.0
        %1838 = vmatpush1.xpose.msra.mxu0 0.0
        %1839 = vmatprep.subr.mxu0 0.0
        %1840 = vmatpush1.xpose.msra.mxu0 0.0
        %1841 = vmatprep.subr.mxu0 0.0
        %1842 = vmatpush1.xpose.msra.mxu0 0.0
        %1843 = vmatprep.subr.mxu0 0.0
        %1844 = vmatpush1.xpose.msra.mxu0 0.0
        %1845 = vmatprep.mubr.f32.mxu0 0.0
        %1846 = vmatmul.mubr.f32.gmra.mrb[0].mxu0 %v1779
        %v1847 = vpop.f32.mrb[0].mxu0
        %v1848 = vadd.f32 0.0, %v1847
        %v1849 = vpop.f32.mrb[0].mxu0
        %1850 = vdwg.mxu0
        %1852 = vrot.lane.b32.xlu0 %v1848, 64
        %v1853 = vpop.permute.xlu0 %1852
        %v1855 = vsel %vm934, %v1771, %v1853
        %1856 = vst [vmem:[%s325] sm:$0xf] %v1855
        %s1857 = sand.u32 %s225, 1
        %s1858 = scalar_lea.sflag [#allocation4], %s1857
        %s1859 = sand.u32 %s225, 1
        %s1860 = smul.addr %s1859, 4
        %s1861 = scalar_lea.vmem [#allocation3], %s1860
        // Predicated region
        $region57: #{tpu_custom_call.1} parent=55 // pred_check
          %p1862 = pneg %p235
        $region58: #{tpu_custom_call.1} parent=55 // pred_check_branch
          %1864 = sbr.rel (%p1862) target = $region60
        $region59: #{tpu_custom_call.1} parent=55 // pred_region
          %s1866 = ssub.s32 64, 64
          %1867 = vsyncadd %s1858, %s1866
          %s1868 = smul.addr %s23, 64
          %s1869 = scalar_lea.hbm %s9, %s1868
          %s1871 = sshll.u32 %s1861, 4
          %s1872 = int_to_ptr.vmem [resolvable:$true] %s1871
          %1874 = dma.vmem_to_hbm [thread:$0]  %s1872, 64, %s1869, %s1858
        $region60: #{tpu_custom_call.1} parent=55 // pred_fallthru
          _
      $region56: #{tpu_custom_call.1} parent=5 // pred_fallthru
        _
      %p1875 = scmp.le.s32.totalorder 2, %s18
      // Predicated region
      $region61: #{tpu_custom_call.1} parent=5 // pred_check
        %p1876 = pneg %p1875
      $region62: #{tpu_custom_call.1} parent=5 // pred_check_branch
        %1878 = sbr.rel (%p1876) target = $region64
      $region63: #{tpu_custom_call.1} parent=5 // pred_region
        %s1879 = ssub.s32 %s18, 2
        // Predicated region
        $region65: #{tpu_custom_call.1} parent=63 // pred_check
          %p1880 = pneg %p241
        $region66: #{tpu_custom_call.1} parent=63 // pred_check_branch
          %1882 = sbr.rel (%p1880) target = $region68
        $region67: #{tpu_custom_call.1} parent=63 // pred_region
          %s1883 = sand.u32 %s226, 1
          %s1884 = scalar_lea.sflag [#allocation4], %s1883
          %s1885 = sand.u32 %s226, 1
          %s1886 = smul.addr %s1885, 4
          %s1887 = scalar_lea.vmem [#allocation3], %s1886
          %1888 = dma.done %s1884, 64
        $region68: #{tpu_custom_call.1} parent=63 // pred_fallthru
          _
      $region64: #{tpu_custom_call.1} parent=5 // pred_fallthru
        _
    $region6: #{tpu_custom_call.1} parent=1 // loop_footer
      %s22 = sadd.s32 1, %s18
    $region7: #{tpu_custom_call.1} parent=1 // loop_footer_branch
      %17 = sbr.rel target = $region3
    $region8: #{tpu_custom_call.1} parent=1 // loop_exit
      _
    %1889 = vsyncpa [#allocation4], 1
    %s1890 = scalar_lea.sflag [#allocation4], 1
    %1891 = vsyncpa %s1890, 1

</llo_original>
